<compile_context>
chip_gen: v7x
topology: tpu7x:2x2x1
jax: 0.10.0
libtpu: 0.0.40
codegen_flags: <defaults>
</compile_context>

<pallas_src>
import functools

import jax
import jax.numpy as jnp
from jax.experimental import pallas as pl
from jax.experimental.pallas import tpu as pltpu


# ----------------------------------------------------------------------------
# Fused forward kernel
# ----------------------------------------------------------------------------
def _lstm_cell(gates, c_prev, H):
    """PyTorch gate order i, f, g, o over the 4H gate columns."""
    i_g = jax.nn.sigmoid(gates[:, 0 * H:1 * H])
    f_g = jax.nn.sigmoid(gates[:, 1 * H:2 * H])
    g_g = jnp.tanh(gates[:, 2 * H:3 * H])
    o_g = jax.nn.sigmoid(gates[:, 3 * H:4 * H])
    c_new = f_g * c_prev + i_g * g_g
    h_new = o_g * jnp.tanh(c_new)
    return h_new, c_new


def _fused_forward_kernel(x_ref, wih1_ref, whh1_ref, b1_ref,
                          wih2_ref, whh2_ref, b2_ref,
                          wfc_ref, bfc_ref,
                          out_ref,
                          xg_sc, h1seq_sc,
                          *, T, B, H):
    # ---- hoisted layer-1 input projection (+bias): one big-M matmul --------
    xg_sc[...] = (
        jnp.dot(x_ref[...], wih1_ref[...], preferred_element_type=jnp.float32)
        + b1_ref[...]
    )                                                        # (T*B, 4H)

    w_hh1 = whh1_ref[...]

    # ---- layer-1 recurrence: one (B,H)@(H,4H) matmul per serial step -------
    h1 = jnp.zeros((B, H), jnp.float32)
    c1 = jnp.zeros((B, H), jnp.float32)
    for t in range(T):                                       # static unroll (T small)
        g = xg_sc[t * B:(t + 1) * B, :] + jnp.dot(
            h1, w_hh1, preferred_element_type=jnp.float32)
        h1, c1 = _lstm_cell(g, c1, H)
        h1seq_sc[t * B:(t + 1) * B, :] = h1

    # dropout1: identity in eval mode.

    # ---- hoisted layer-2 input projection over the whole h1 sequence -------
    xg_sc[...] = (
        jnp.dot(h1seq_sc[...], wih2_ref[...],
                preferred_element_type=jnp.float32)
        + b2_ref[...]
    )                                                        # (T*B, 4H), scratch reused

    w_hh2 = whh2_ref[...]

    # ---- layer-2 recurrence; only the final h2 is consumed ------------------
    h2 = jnp.zeros((B, H), jnp.float32)
    c2 = jnp.zeros((B, H), jnp.float32)
    for t in range(T):
        g = xg_sc[t * B:(t + 1) * B, :] + jnp.dot(
            h2, w_hh2, preferred_element_type=jnp.float32)
        h2, c2 = _lstm_cell(g, c2, H)

    # dropout2: identity in eval mode.

    # ---- final Linear on the last timestep's hidden state -------------------
    out_ref[...] = (
        jnp.dot(h2, wfc_ref[...], preferred_element_type=jnp.float32)
        + bfc_ref[...]
    ).astype(out_ref.dtype)


# ----------------------------------------------------------------------------
# Wrapper
# ----------------------------------------------------------------------------
@jax.jit
def lstm_model_forward(x_btd, params):
    """x_btd: (B, T, input_size), batch-first like PyTorch. Returns (B, output_size)."""
    B, T, D = x_btd.shape
    H = params["w_hh1"].shape[0]
    O = params["w_fc"].shape[1]

    # Time-major flatten: row t*B + b holds x[b, t, :]. Tiny XLA-side transpose;
    # keeps every per-step access inside the kernel a static contiguous slice.
    x_flat = jnp.transpose(x_btd, (1, 0, 2)).reshape(T * B, D)

    kernel = functools.partial(_fused_forward_kernel, T=T, B=B, H=H)

    return pl.pallas_call(
        kernel,
        out_shape=jax.ShapeDtypeStruct((B, O), x_btd.dtype),
        in_specs=[
            pl.BlockSpec((T * B, D), lambda: (0, 0)),        # x (time-major, flattened)
            pl.BlockSpec((D, 4 * H), lambda: (0, 0)),        # W_ih layer 1
            pl.BlockSpec((H, 4 * H), lambda: (0, 0)),        # W_hh layer 1
            pl.BlockSpec((1, 4 * H), lambda: (0, 0)),        # bias layer 1
            pl.BlockSpec((H, 4 * H), lambda: (0, 0)),        # W_ih layer 2
            pl.BlockSpec((H, 4 * H), lambda: (0, 0)),        # W_hh layer 2
            pl.BlockSpec((1, 4 * H), lambda: (0, 0)),        # bias layer 2
            pl.BlockSpec((H, O), lambda: (0, 0)),            # W_fc
            pl.BlockSpec((1, O), lambda: (0, 0)),            # b_fc
        ],
        out_specs=pl.BlockSpec((B, O), lambda: (0, 0)),
        scratch_shapes=[
            pltpu.VMEM((T * B, 4 * H), jnp.float32),         # projected gates (reused L1/L2)
            pltpu.VMEM((T * B, H), jnp.float32),             # layer-1 hidden sequence
        ],
    )(x_flat, params["w_ih1"], params["w_hh1"], params["b1"],
      params["w_ih2"], params["w_hh2"], params["b2"],
      params["w_fc"], params["b_fc"])


def init_params(key, input_size, hidden_size, output_size):
    """Deterministic init mirroring PyTorch shapes (weights pre-transposed to (in, 4H))."""
    ks = jax.random.split(key, 10)
    H = hidden_size
    s_lstm = 1.0 / jnp.sqrt(H)
    s_fc = 1.0 / jnp.sqrt(H)

    def u(k, shape, s):
        return jax.random.uniform(k, shape, jnp.float32, -s, s)

    params = {
        # layer 1: PyTorch weight_ih (4H, D) -> transposed (D, 4H); bias_ih + bias_hh
        "w_ih1": u(ks[0], (input_size, 4 * H), s_lstm),
        "w_hh1": u(ks[1], (H, 4 * H), s_lstm),
        "b1": u(ks[2], (1, 4 * H), s_lstm) + u(ks[3], (1, 4 * H), s_lstm),
        # layer 2
        "w_ih2": u(ks[4], (H, 4 * H), s_lstm),
        "w_hh2": u(ks[5], (H, 4 * H), s_lstm),
        "b2": u(ks[6], (1, 4 * H), s_lstm) + u(ks[7], (1, 4 * H), s_lstm),
        # fc: PyTorch weight (O, H) -> transposed (H, O)
        "w_fc": u(ks[8], (H, output_size), s_fc),
        "b_fc": u(ks[9], (1, output_size), s_fc),
    }
    return params


if __name__ == "__main__":
    # Small shapes consistent with the module's forward:
    # x: (batch=2, seq=8, input_size=8), hidden_size=32, output_size=4.
    B, T, INPUT, HIDDEN, OUTPUT = 2, 8, 8, 32, 4

    key = jax.random.PRNGKey(0)
    kx, kp = jax.random.split(key)
    x = jax.random.normal(kx, (B, T, INPUT), jnp.float32)
    params = init_params(kp, INPUT, HIDDEN, OUTPUT)

    out = lstm_model_forward(x, params)
    out = jax.block_until_ready(out)
    assert out.shape == (B, OUTPUT), out.shape
    print("KERNEL_OK")
</pallas_src>

<mosaic_0001>
module attributes {stable_mosaic.version = 11 : i64} {
  func.func @_fused_forward_kernel(%arg0: memref<16x8xf32, #tpu.memory_space<vmem>>, %arg1: memref<8x128xf32, #tpu.memory_space<vmem>>, %arg2: memref<32x128xf32, #tpu.memory_space<vmem>>, %arg3: memref<1x128xf32, #tpu.memory_space<vmem>>, %arg4: memref<32x128xf32, #tpu.memory_space<vmem>>, %arg5: memref<32x128xf32, #tpu.memory_space<vmem>>, %arg6: memref<1x128xf32, #tpu.memory_space<vmem>>, %arg7: memref<32x4xf32, #tpu.memory_space<vmem>>, %arg8: memref<1x4xf32, #tpu.memory_space<vmem>>, %arg9: memref<2x4xf32, #tpu.memory_space<vmem>>, %arg10: memref<16x128xf32, #tpu.memory_space<vmem>>, %arg11: memref<16x32xf32, #tpu.memory_space<vmem>>) attributes {dimension_semantics = [], scalar_prefetch = 0 : i64, scratch_operands = 2 : i64, tpu.core_type = #tpu.core_type<tc>} {
    %c0 = arith.constant 0 : index
    %c0_0 = arith.constant 0 : index
    %0 = vector.load %arg0[%c0, %c0_0] : memref<16x8xf32, #tpu.memory_space<vmem>>, vector<16x8xf32>
    %c0_1 = arith.constant 0 : index
    %c0_2 = arith.constant 0 : index
    %1 = vector.load %arg1[%c0_1, %c0_2] : memref<8x128xf32, #tpu.memory_space<vmem>>, vector<8x128xf32>
    %cst = arith.constant dense<0.000000e+00> : vector<16x128xf32>
    %2 = tpu.matmul %0, %1, %cst {dimension_numbers = #tpu.dot_dimension_numbers<[1], [0], [0], [1], [0, 0, 1, 1], [], []>} : vector<16x8xf32>, vector<8x128xf32>, vector<16x128xf32> -> vector<16x128xf32>
    %c0_3 = arith.constant 0 : index
    %c0_4 = arith.constant 0 : index
    %3 = vector.load %arg3[%c0_3, %c0_4] : memref<1x128xf32, #tpu.memory_space<vmem>>, vector<1x128xf32>
    %4 = vector.broadcast %3 : vector<1x128xf32> to vector<16x128xf32>
    %5 = arith.addf %2, %4 : vector<16x128xf32>
    %c0_5 = arith.constant 0 : index
    %c0_6 = arith.constant 0 : index
    %6 = vector.load %arg10[%c0_5, %c0_6] : memref<16x128xf32, #tpu.memory_space<vmem>>, vector<16x128xf32>
    tpu.vector_store %arg10[%c0_5, %c0_6], %5 {strides = array<i32>} : memref<16x128xf32, #tpu.memory_space<vmem>>, vector<16x128xf32>,
    %c0_7 = arith.constant 0 : index
    %c0_8 = arith.constant 0 : index
    %7 = vector.load %arg2[%c0_7, %c0_8] : memref<32x128xf32, #tpu.memory_space<vmem>>, vector<32x128xf32>
    %cst_9 = arith.constant 0.000000e+00 : f32
    %8 = vector.broadcast %cst_9 : f32 to vector<2x32xf32>
    %cst_10 = arith.constant 0.000000e+00 : f32
    %9 = vector.broadcast %cst_10 : f32 to vector<2x32xf32>
    %c0_11 = arith.constant 0 : index
    %c0_12 = arith.constant 0 : index
    %10 = vector.load %arg10[%c0_11, %c0_12] : memref<16x128xf32, #tpu.memory_space<vmem>>, vector<2x128xf32>
    %cst_13 = arith.constant dense<0.000000e+00> : vector<2x128xf32>
    %11 = tpu.matmul %8, %7, %cst_13 {dimension_numbers = #tpu.dot_dimension_numbers<[1], [0], [0], [1], [0, 0, 1, 1], [], []>} : vector<2x32xf32>, vector<32x128xf32>, vector<2x128xf32> -> vector<2x128xf32>
    %12 = arith.addf %10, %11 : vector<2x128xf32>
    %13 = vector.extract_strided_slice %12 {offsets = [0, 0], sizes = [2, 32], strides = [1, 1]} : vector<2x128xf32> to vector<2x32xf32>
    %14 = arith.negf %13 : vector<2x32xf32>
    %15 = math.exp %14 : vector<2x32xf32>
    %cst_14 = arith.constant 1.000000e+00 : f32
    %16 = vector.broadcast %cst_14 : f32 to vector<2x32xf32>
    %17 = arith.addf %16, %15 : vector<2x32xf32>
    %18 = arith.divf %16, %17 : vector<2x32xf32>
    %19 = vector.extract_strided_slice %12 {offsets = [0, 32], sizes = [2, 32], strides = [1, 1]} : vector<2x128xf32> to vector<2x32xf32>
    %20 = arith.negf %19 : vector<2x32xf32>
    %21 = math.exp %20 : vector<2x32xf32>
    %cst_15 = arith.constant 1.000000e+00 : f32
    %22 = vector.broadcast %cst_15 : f32 to vector<2x32xf32>
    %23 = arith.addf %22, %21 : vector<2x32xf32>
    %24 = arith.divf %22, %23 : vector<2x32xf32>
    %25 = vector.extract_strided_slice %12 {offsets = [0, 64], sizes = [2, 32], strides = [1, 1]} : vector<2x128xf32> to vector<2x32xf32>
    %26 = math.tanh %25 : vector<2x32xf32>
    %27 = vector.extract_strided_slice %12 {offsets = [0, 96], sizes = [2, 32], strides = [1, 1]} : vector<2x128xf32> to vector<2x32xf32>
    %28 = arith.negf %27 : vector<2x32xf32>
    %29 = math.exp %28 : vector<2x32xf32>
    %cst_16 = arith.constant 1.000000e+00 : f32
    %30 = vector.broadcast %cst_16 : f32 to vector<2x32xf32>
    %31 = arith.addf %30, %29 : vector<2x32xf32>
    %32 = arith.divf %30, %31 : vector<2x32xf32>
    %33 = arith.mulf %24, %9 : vector<2x32xf32>
    %34 = arith.mulf %18, %26 : vector<2x32xf32>
    %35 = arith.addf %33, %34 : vector<2x32xf32>
    %36 = math.tanh %35 : vector<2x32xf32>
    %37 = arith.mulf %32, %36 : vector<2x32xf32>
    %c0_17 = arith.constant 0 : index
    %c0_18 = arith.constant 0 : index
    %38 = vector.load %arg11[%c0_17, %c0_18] : memref<16x32xf32, #tpu.memory_space<vmem>>, vector<2x32xf32>
    tpu.vector_store %arg11[%c0_17, %c0_18], %37 {strides = array<i32>} : memref<16x32xf32, #tpu.memory_space<vmem>>, vector<2x32xf32>,
    %c2 = arith.constant 2 : index
    %c0_19 = arith.constant 0 : index
    %39 = vector.load %arg10[%c2, %c0_19] : memref<16x128xf32, #tpu.memory_space<vmem>>, vector<2x128xf32>
    %cst_20 = arith.constant dense<0.000000e+00> : vector<2x128xf32>
    %40 = tpu.matmul %37, %7, %cst_20 {dimension_numbers = #tpu.dot_dimension_numbers<[1], [0], [0], [1], [0, 0, 1, 1], [], []>} : vector<2x32xf32>, vector<32x128xf32>, vector<2x128xf32> -> vector<2x128xf32>
    %41 = arith.addf %39, %40 : vector<2x128xf32>
    %42 = vector.extract_strided_slice %41 {offsets = [0, 0], sizes = [2, 32], strides = [1, 1]} : vector<2x128xf32> to vector<2x32xf32>
    %43 = arith.negf %42 : vector<2x32xf32>
    %44 = math.exp %43 : vector<2x32xf32>
    %cst_21 = arith.constant 1.000000e+00 : f32
    %45 = vector.broadcast %cst_21 : f32 to vector<2x32xf32>
    %46 = arith.addf %45, %44 : vector<2x32xf32>
    %47 = arith.divf %45, %46 : vector<2x32xf32>
    %48 = vector.extract_strided_slice %41 {offsets = [0, 32], sizes = [2, 32], strides = [1, 1]} : vector<2x128xf32> to vector<2x32xf32>
    %49 = arith.negf %48 : vector<2x32xf32>
    %50 = math.exp %49 : vector<2x32xf32>
    %cst_22 = arith.constant 1.000000e+00 : f32
    %51 = vector.broadcast %cst_22 : f32 to vector<2x32xf32>
    %52 = arith.addf %51, %50 : vector<2x32xf32>
    %53 = arith.divf %51, %52 : vector<2x32xf32>
    %54 = vector.extract_strided_slice %41 {offsets = [0, 64], sizes = [2, 32], strides = [1, 1]} : vector<2x128xf32> to vector<2x32xf32>
    %55 = math.tanh %54 : vector<2x32xf32>
    %56 = vector.extract_strided_slice %41 {offsets = [0, 96], sizes = [2, 32], strides = [1, 1]} : vector<2x128xf32> to vector<2x32xf32>
    %57 = arith.negf %56 : vector<2x32xf32>
    %58 = math.exp %57 : vector<2x32xf32>
    %cst_23 = arith.constant 1.000000e+00 : f32
    %59 = vector.broadcast %cst_23 : f32 to vector<2x32xf32>
    %60 = arith.addf %59, %58 : vector<2x32xf32>
    %61 = arith.divf %59, %60 : vector<2x32xf32>
    %62 = arith.mulf %53, %35 : vector<2x32xf32>
    %63 = arith.mulf %47, %55 : vector<2x32xf32>
    %64 = arith.addf %62, %63 : vector<2x32xf32>
    %65 = math.tanh %64 : vector<2x32xf32>
    %66 = arith.mulf %61, %65 : vector<2x32xf32>
    %c2_24 = arith.constant 2 : index
    %c0_25 = arith.constant 0 : index
    %67 = vector.load %arg11[%c2_24, %c0_25] : memref<16x32xf32, #tpu.memory_space<vmem>>, vector<2x32xf32>
    tpu.vector_store %arg11[%c2_24, %c0_25], %66 {strides = array<i32>} : memref<16x32xf32, #tpu.memory_space<vmem>>, vector<2x32xf32>,
    %c4 = arith.constant 4 : index
    %c0_26 = arith.constant 0 : index
    %68 = vector.load %arg10[%c4, %c0_26] : memref<16x128xf32, #tpu.memory_space<vmem>>, vector<2x128xf32>
    %cst_27 = arith.constant dense<0.000000e+00> : vector<2x128xf32>
    %69 = tpu.matmul %66, %7, %cst_27 {dimension_numbers = #tpu.dot_dimension_numbers<[1], [0], [0], [1], [0, 0, 1, 1], [], []>} : vector<2x32xf32>, vector<32x128xf32>, vector<2x128xf32> -> vector<2x128xf32>
    %70 = arith.addf %68, %69 : vector<2x128xf32>
    %71 = vector.extract_strided_slice %70 {offsets = [0, 0], sizes = [2, 32], strides = [1, 1]} : vector<2x128xf32> to vector<2x32xf32>
    %72 = arith.negf %71 : vector<2x32xf32>
    %73 = math.exp %72 : vector<2x32xf32>
    %cst_28 = arith.constant 1.000000e+00 : f32
    %74 = vector.broadcast %cst_28 : f32 to vector<2x32xf32>
    %75 = arith.addf %74, %73 : vector<2x32xf32>
    %76 = arith.divf %74, %75 : vector<2x32xf32>
    %77 = vector.extract_strided_slice %70 {offsets = [0, 32], sizes = [2, 32], strides = [1, 1]} : vector<2x128xf32> to vector<2x32xf32>
    %78 = arith.negf %77 : vector<2x32xf32>
    %79 = math.exp %78 : vector<2x32xf32>
    %cst_29 = arith.constant 1.000000e+00 : f32
    %80 = vector.broadcast %cst_29 : f32 to vector<2x32xf32>
    %81 = arith.addf %80, %79 : vector<2x32xf32>
    %82 = arith.divf %80, %81 : vector<2x32xf32>
    %83 = vector.extract_strided_slice %70 {offsets = [0, 64], sizes = [2, 32], strides = [1, 1]} : vector<2x128xf32> to vector<2x32xf32>
    %84 = math.tanh %83 : vector<2x32xf32>
    %85 = vector.extract_strided_slice %70 {offsets = [0, 96], sizes = [2, 32], strides = [1, 1]} : vector<2x128xf32> to vector<2x32xf32>
    %86 = arith.negf %85 : vector<2x32xf32>
    %87 = math.exp %86 : vector<2x32xf32>
    %cst_30 = arith.constant 1.000000e+00 : f32
    %88 = vector.broadcast %cst_30 : f32 to vector<2x32xf32>
    %89 = arith.addf %88, %87 : vector<2x32xf32>
    %90 = arith.divf %88, %89 : vector<2x32xf32>
    %91 = arith.mulf %82, %64 : vector<2x32xf32>
    %92 = arith.mulf %76, %84 : vector<2x32xf32>
    %93 = arith.addf %91, %92 : vector<2x32xf32>
    %94 = math.tanh %93 : vector<2x32xf32>
    %95 = arith.mulf %90, %94 : vector<2x32xf32>
    %c4_31 = arith.constant 4 : index
    %c0_32 = arith.constant 0 : index
    %96 = vector.load %arg11[%c4_31, %c0_32] : memref<16x32xf32, #tpu.memory_space<vmem>>, vector<2x32xf32>
    tpu.vector_store %arg11[%c4_31, %c0_32], %95 {strides = array<i32>} : memref<16x32xf32, #tpu.memory_space<vmem>>, vector<2x32xf32>,
    %c6 = arith.constant 6 : index
    %c0_33 = arith.constant 0 : index
    %97 = vector.load %arg10[%c6, %c0_33] : memref<16x128xf32, #tpu.memory_space<vmem>>, vector<2x128xf32>
    %cst_34 = arith.constant dense<0.000000e+00> : vector<2x128xf32>
    %98 = tpu.matmul %95, %7, %cst_34 {dimension_numbers = #tpu.dot_dimension_numbers<[1], [0], [0], [1], [0, 0, 1, 1], [], []>} : vector<2x32xf32>, vector<32x128xf32>, vector<2x128xf32> -> vector<2x128xf32>
    %99 = arith.addf %97, %98 : vector<2x128xf32>
    %100 = vector.extract_strided_slice %99 {offsets = [0, 0], sizes = [2, 32], strides = [1, 1]} : vector<2x128xf32> to vector<2x32xf32>
    %101 = arith.negf %100 : vector<2x32xf32>
    %102 = math.exp %101 : vector<2x32xf32>
    %cst_35 = arith.constant 1.000000e+00 : f32
    %103 = vector.broadcast %cst_35 : f32 to vector<2x32xf32>
    %104 = arith.addf %103, %102 : vector<2x32xf32>
    %105 = arith.divf %103, %104 : vector<2x32xf32>
    %106 = vector.extract_strided_slice %99 {offsets = [0, 32], sizes = [2, 32], strides = [1, 1]} : vector<2x128xf32> to vector<2x32xf32>
    %107 = arith.negf %106 : vector<2x32xf32>
    %108 = math.exp %107 : vector<2x32xf32>
    %cst_36 = arith.constant 1.000000e+00 : f32
    %109 = vector.broadcast %cst_36 : f32 to vector<2x32xf32>
    %110 = arith.addf %109, %108 : vector<2x32xf32>
    %111 = arith.divf %109, %110 : vector<2x32xf32>
    %112 = vector.extract_strided_slice %99 {offsets = [0, 64], sizes = [2, 32], strides = [1, 1]} : vector<2x128xf32> to vector<2x32xf32>
    %113 = math.tanh %112 : vector<2x32xf32>
    %114 = vector.extract_strided_slice %99 {offsets = [0, 96], sizes = [2, 32], strides = [1, 1]} : vector<2x128xf32> to vector<2x32xf32>
    %115 = arith.negf %114 : vector<2x32xf32>
    %116 = math.exp %115 : vector<2x32xf32>
    %cst_37 = arith.constant 1.000000e+00 : f32
    %117 = vector.broadcast %cst_37 : f32 to vector<2x32xf32>
    %118 = arith.addf %117, %116 : vector<2x32xf32>
    %119 = arith.divf %117, %118 : vector<2x32xf32>
    %120 = arith.mulf %111, %93 : vector<2x32xf32>
    %121 = arith.mulf %105, %113 : vector<2x32xf32>
    %122 = arith.addf %120, %121 : vector<2x32xf32>
    %123 = math.tanh %122 : vector<2x32xf32>
    %124 = arith.mulf %119, %123 : vector<2x32xf32>
    %c6_38 = arith.constant 6 : index
    %c0_39 = arith.constant 0 : index
    %125 = vector.load %arg11[%c6_38, %c0_39] : memref<16x32xf32, #tpu.memory_space<vmem>>, vector<2x32xf32>
    tpu.vector_store %arg11[%c6_38, %c0_39], %124 {strides = array<i32>} : memref<16x32xf32, #tpu.memory_space<vmem>>, vector<2x32xf32>,
    %c8 = arith.constant 8 : index
    %c0_40 = arith.constant 0 : index
    %126 = vector.load %arg10[%c8, %c0_40] : memref<16x128xf32, #tpu.memory_space<vmem>>, vector<2x128xf32>
    %cst_41 = arith.constant dense<0.000000e+00> : vector<2x128xf32>
    %127 = tpu.matmul %124, %7, %cst_41 {dimension_numbers = #tpu.dot_dimension_numbers<[1], [0], [0], [1], [0, 0, 1, 1], [], []>} : vector<2x32xf32>, vector<32x128xf32>, vector<2x128xf32> -> vector<2x128xf32>
    %128 = arith.addf %126, %127 : vector<2x128xf32>
    %129 = vector.extract_strided_slice %128 {offsets = [0, 0], sizes = [2, 32], strides = [1, 1]} : vector<2x128xf32> to vector<2x32xf32>
    %130 = arith.negf %129 : vector<2x32xf32>
    %131 = math.exp %130 : vector<2x32xf32>
    %cst_42 = arith.constant 1.000000e+00 : f32
    %132 = vector.broadcast %cst_42 : f32 to vector<2x32xf32>
    %133 = arith.addf %132, %131 : vector<2x32xf32>
    %134 = arith.divf %132, %133 : vector<2x32xf32>
    %135 = vector.extract_strided_slice %128 {offsets = [0, 32], sizes = [2, 32], strides = [1, 1]} : vector<2x128xf32> to vector<2x32xf32>
    %136 = arith.negf %135 : vector<2x32xf32>
    %137 = math.exp %136 : vector<2x32xf32>
    %cst_43 = arith.constant 1.000000e+00 : f32
    %138 = vector.broadcast %cst_43 : f32 to vector<2x32xf32>
    %139 = arith.addf %138, %137 : vector<2x32xf32>
    %140 = arith.divf %138, %139 : vector<2x32xf32>
    %141 = vector.extract_strided_slice %128 {offsets = [0, 64], sizes = [2, 32], strides = [1, 1]} : vector<2x128xf32> to vector<2x32xf32>
    %142 = math.tanh %141 : vector<2x32xf32>
    %143 = vector.extract_strided_slice %128 {offsets = [0, 96], sizes = [2, 32], strides = [1, 1]} : vector<2x128xf32> to vector<2x32xf32>
    %144 = arith.negf %143 : vector<2x32xf32>
    %145 = math.exp %144 : vector<2x32xf32>
    %cst_44 = arith.constant 1.000000e+00 : f32
    %146 = vector.broadcast %cst_44 : f32 to vector<2x32xf32>
    %147 = arith.addf %146, %145 : vector<2x32xf32>
    %148 = arith.divf %146, %147 : vector<2x32xf32>
    %149 = arith.mulf %140, %122 : vector<2x32xf32>
    %150 = arith.mulf %134, %142 : vector<2x32xf32>
    %151 = arith.addf %149, %150 : vector<2x32xf32>
    %152 = math.tanh %151 : vector<2x32xf32>
    %153 = arith.mulf %148, %152 : vector<2x32xf32>
    %c8_45 = arith.constant 8 : index
    %c0_46 = arith.constant 0 : index
    %154 = vector.load %arg11[%c8_45, %c0_46] : memref<16x32xf32, #tpu.memory_space<vmem>>, vector<2x32xf32>
    tpu.vector_store %arg11[%c8_45, %c0_46], %153 {strides = array<i32>} : memref<16x32xf32, #tpu.memory_space<vmem>>, vector<2x32xf32>,
    %c10 = arith.constant 10 : index
    %c0_47 = arith.constant 0 : index
    %155 = vector.load %arg10[%c10, %c0_47] : memref<16x128xf32, #tpu.memory_space<vmem>>, vector<2x128xf32>
    %cst_48 = arith.constant dense<0.000000e+00> : vector<2x128xf32>
    %156 = tpu.matmul %153, %7, %cst_48 {dimension_numbers = #tpu.dot_dimension_numbers<[1], [0], [0], [1], [0, 0, 1, 1], [], []>} : vector<2x32xf32>, vector<32x128xf32>, vector<2x128xf32> -> vector<2x128xf32>
    %157 = arith.addf %155, %156 : vector<2x128xf32>
    %158 = vector.extract_strided_slice %157 {offsets = [0, 0], sizes = [2, 32], strides = [1, 1]} : vector<2x128xf32> to vector<2x32xf32>
    %159 = arith.negf %158 : vector<2x32xf32>
    %160 = math.exp %159 : vector<2x32xf32>
    %cst_49 = arith.constant 1.000000e+00 : f32
    %161 = vector.broadcast %cst_49 : f32 to vector<2x32xf32>
    %162 = arith.addf %161, %160 : vector<2x32xf32>
    %163 = arith.divf %161, %162 : vector<2x32xf32>
    %164 = vector.extract_strided_slice %157 {offsets = [0, 32], sizes = [2, 32], strides = [1, 1]} : vector<2x128xf32> to vector<2x32xf32>
    %165 = arith.negf %164 : vector<2x32xf32>
    %166 = math.exp %165 : vector<2x32xf32>
    %cst_50 = arith.constant 1.000000e+00 : f32
    %167 = vector.broadcast %cst_50 : f32 to vector<2x32xf32>
    %168 = arith.addf %167, %166 : vector<2x32xf32>
    %169 = arith.divf %167, %168 : vector<2x32xf32>
    %170 = vector.extract_strided_slice %157 {offsets = [0, 64], sizes = [2, 32], strides = [1, 1]} : vector<2x128xf32> to vector<2x32xf32>
    %171 = math.tanh %170 : vector<2x32xf32>
    %172 = vector.extract_strided_slice %157 {offsets = [0, 96], sizes = [2, 32], strides = [1, 1]} : vector<2x128xf32> to vector<2x32xf32>
    %173 = arith.negf %172 : vector<2x32xf32>
    %174 = math.exp %173 : vector<2x32xf32>
    %cst_51 = arith.constant 1.000000e+00 : f32
    %175 = vector.broadcast %cst_51 : f32 to vector<2x32xf32>
    %176 = arith.addf %175, %174 : vector<2x32xf32>
    %177 = arith.divf %175, %176 : vector<2x32xf32>
    %178 = arith.mulf %169, %151 : vector<2x32xf32>
    %179 = arith.mulf %163, %171 : vector<2x32xf32>
    %180 = arith.addf %178, %179 : vector<2x32xf32>
    %181 = math.tanh %180 : vector<2x32xf32>
    %182 = arith.mulf %177, %181 : vector<2x32xf32>
    %c10_52 = arith.constant 10 : index
    %c0_53 = arith.constant 0 : index
    %183 = vector.load %arg11[%c10_52, %c0_53] : memref<16x32xf32, #tpu.memory_space<vmem>>, vector<2x32xf32>
    tpu.vector_store %arg11[%c10_52, %c0_53], %182 {strides = array<i32>} : memref<16x32xf32, #tpu.memory_space<vmem>>, vector<2x32xf32>,
    %c12 = arith.constant 12 : index
    %c0_54 = arith.constant 0 : index
    %184 = vector.load %arg10[%c12, %c0_54] : memref<16x128xf32, #tpu.memory_space<vmem>>, vector<2x128xf32>
    %cst_55 = arith.constant dense<0.000000e+00> : vector<2x128xf32>
    %185 = tpu.matmul %182, %7, %cst_55 {dimension_numbers = #tpu.dot_dimension_numbers<[1], [0], [0], [1], [0, 0, 1, 1], [], []>} : vector<2x32xf32>, vector<32x128xf32>, vector<2x128xf32> -> vector<2x128xf32>
    %186 = arith.addf %184, %185 : vector<2x128xf32>
    %187 = vector.extract_strided_slice %186 {offsets = [0, 0], sizes = [2, 32], strides = [1, 1]} : vector<2x128xf32> to vector<2x32xf32>
    %188 = arith.negf %187 : vector<2x32xf32>
    %189 = math.exp %188 : vector<2x32xf32>
    %cst_56 = arith.constant 1.000000e+00 : f32
    %190 = vector.broadcast %cst_56 : f32 to vector<2x32xf32>
    %191 = arith.addf %190, %189 : vector<2x32xf32>
    %192 = arith.divf %190, %191 : vector<2x32xf32>
    %193 = vector.extract_strided_slice %186 {offsets = [0, 32], sizes = [2, 32], strides = [1, 1]} : vector<2x128xf32> to vector<2x32xf32>
    %194 = arith.negf %193 : vector<2x32xf32>
    %195 = math.exp %194 : vector<2x32xf32>
    %cst_57 = arith.constant 1.000000e+00 : f32
    %196 = vector.broadcast %cst_57 : f32 to vector<2x32xf32>
    %197 = arith.addf %196, %195 : vector<2x32xf32>
    %198 = arith.divf %196, %197 : vector<2x32xf32>
    %199 = vector.extract_strided_slice %186 {offsets = [0, 64], sizes = [2, 32], strides = [1, 1]} : vector<2x128xf32> to vector<2x32xf32>
    %200 = math.tanh %199 : vector<2x32xf32>
    %201 = vector.extract_strided_slice %186 {offsets = [0, 96], sizes = [2, 32], strides = [1, 1]} : vector<2x128xf32> to vector<2x32xf32>
    %202 = arith.negf %201 : vector<2x32xf32>
    %203 = math.exp %202 : vector<2x32xf32>
    %cst_58 = arith.constant 1.000000e+00 : f32
    %204 = vector.broadcast %cst_58 : f32 to vector<2x32xf32>
    %205 = arith.addf %204, %203 : vector<2x32xf32>
    %206 = arith.divf %204, %205 : vector<2x32xf32>
    %207 = arith.mulf %198, %180 : vector<2x32xf32>
    %208 = arith.mulf %192, %200 : vector<2x32xf32>
    %209 = arith.addf %207, %208 : vector<2x32xf32>
    %210 = math.tanh %209 : vector<2x32xf32>
    %211 = arith.mulf %206, %210 : vector<2x32xf32>
    %c12_59 = arith.constant 12 : index
    %c0_60 = arith.constant 0 : index
    %212 = vector.load %arg11[%c12_59, %c0_60] : memref<16x32xf32, #tpu.memory_space<vmem>>, vector<2x32xf32>
    tpu.vector_store %arg11[%c12_59, %c0_60], %211 {strides = array<i32>} : memref<16x32xf32, #tpu.memory_space<vmem>>, vector<2x32xf32>,
    %c14 = arith.constant 14 : index
    %c0_61 = arith.constant 0 : index
    %213 = vector.load %arg10[%c14, %c0_61] : memref<16x128xf32, #tpu.memory_space<vmem>>, vector<2x128xf32>
    %cst_62 = arith.constant dense<0.000000e+00> : vector<2x128xf32>
    %214 = tpu.matmul %211, %7, %cst_62 {dimension_numbers = #tpu.dot_dimension_numbers<[1], [0], [0], [1], [0, 0, 1, 1], [], []>} : vector<2x32xf32>, vector<32x128xf32>, vector<2x128xf32> -> vector<2x128xf32>
    %215 = arith.addf %213, %214 : vector<2x128xf32>
    %216 = vector.extract_strided_slice %215 {offsets = [0, 0], sizes = [2, 32], strides = [1, 1]} : vector<2x128xf32> to vector<2x32xf32>
    %217 = arith.negf %216 : vector<2x32xf32>
    %218 = math.exp %217 : vector<2x32xf32>
    %cst_63 = arith.constant 1.000000e+00 : f32
    %219 = vector.broadcast %cst_63 : f32 to vector<2x32xf32>
    %220 = arith.addf %219, %218 : vector<2x32xf32>
    %221 = arith.divf %219, %220 : vector<2x32xf32>
    %222 = vector.extract_strided_slice %215 {offsets = [0, 32], sizes = [2, 32], strides = [1, 1]} : vector<2x128xf32> to vector<2x32xf32>
    %223 = arith.negf %222 : vector<2x32xf32>
    %224 = math.exp %223 : vector<2x32xf32>
    %cst_64 = arith.constant 1.000000e+00 : f32
    %225 = vector.broadcast %cst_64 : f32 to vector<2x32xf32>
    %226 = arith.addf %225, %224 : vector<2x32xf32>
    %227 = arith.divf %225, %226 : vector<2x32xf32>
    %228 = vector.extract_strided_slice %215 {offsets = [0, 64], sizes = [2, 32], strides = [1, 1]} : vector<2x128xf32> to vector<2x32xf32>
    %229 = math.tanh %228 : vector<2x32xf32>
    %230 = vector.extract_strided_slice %215 {offsets = [0, 96], sizes = [2, 32], strides = [1, 1]} : vector<2x128xf32> to vector<2x32xf32>
    %231 = arith.negf %230 : vector<2x32xf32>
    %232 = math.exp %231 : vector<2x32xf32>
    %cst_65 = arith.constant 1.000000e+00 : f32
    %233 = vector.broadcast %cst_65 : f32 to vector<2x32xf32>
    %234 = arith.addf %233, %232 : vector<2x32xf32>
    %235 = arith.divf %233, %234 : vector<2x32xf32>
    %236 = arith.mulf %227, %209 : vector<2x32xf32>
    %237 = arith.mulf %221, %229 : vector<2x32xf32>
    %238 = arith.addf %236, %237 : vector<2x32xf32>
    %239 = math.tanh %238 : vector<2x32xf32>
    %240 = arith.mulf %235, %239 : vector<2x32xf32>
    %c14_66 = arith.constant 14 : index
    %c0_67 = arith.constant 0 : index
    %241 = vector.load %arg11[%c14_66, %c0_67] : memref<16x32xf32, #tpu.memory_space<vmem>>, vector<2x32xf32>
    tpu.vector_store %arg11[%c14_66, %c0_67], %240 {strides = array<i32>} : memref<16x32xf32, #tpu.memory_space<vmem>>, vector<2x32xf32>,
    %c0_68 = arith.constant 0 : index
    %c0_69 = arith.constant 0 : index
    %242 = vector.load %arg11[%c0_68, %c0_69] : memref<16x32xf32, #tpu.memory_space<vmem>>, vector<16x32xf32>
    %c0_70 = arith.constant 0 : index
    %c0_71 = arith.constant 0 : index
    %243 = vector.load %arg4[%c0_70, %c0_71] : memref<32x128xf32, #tpu.memory_space<vmem>>, vector<32x128xf32>
    %cst_72 = arith.constant dense<0.000000e+00> : vector<16x128xf32>
    %244 = tpu.matmul %242, %243, %cst_72 {dimension_numbers = #tpu.dot_dimension_numbers<[1], [0], [0], [1], [0, 0, 1, 1], [], []>} : vector<16x32xf32>, vector<32x128xf32>, vector<16x128xf32> -> vector<16x128xf32>
    %c0_73 = arith.constant 0 : index
    %c0_74 = arith.constant 0 : index
    %245 = vector.load %arg6[%c0_73, %c0_74] : memref<1x128xf32, #tpu.memory_space<vmem>>, vector<1x128xf32>
    %246 = vector.broadcast %245 : vector<1x128xf32> to vector<16x128xf32>
    %247 = arith.addf %244, %246 : vector<16x128xf32>
    %c0_75 = arith.constant 0 : index
    %c0_76 = arith.constant 0 : index
    %248 = vector.load %arg10[%c0_75, %c0_76] : memref<16x128xf32, #tpu.memory_space<vmem>>, vector<16x128xf32>
    tpu.vector_store %arg10[%c0_75, %c0_76], %247 {strides = array<i32>} : memref<16x128xf32, #tpu.memory_space<vmem>>, vector<16x128xf32>,
    %c0_77 = arith.constant 0 : index
    %c0_78 = arith.constant 0 : index
    %249 = vector.load %arg5[%c0_77, %c0_78] : memref<32x128xf32, #tpu.memory_space<vmem>>, vector<32x128xf32>
    %cst_79 = arith.constant 0.000000e+00 : f32
    %250 = vector.broadcast %cst_79 : f32 to vector<2x32xf32>
    %cst_80 = arith.constant 0.000000e+00 : f32
    %251 = vector.broadcast %cst_80 : f32 to vector<2x32xf32>
    %c0_81 = arith.constant 0 : index
    %c0_82 = arith.constant 0 : index
    %252 = vector.load %arg10[%c0_81, %c0_82] : memref<16x128xf32, #tpu.memory_space<vmem>>, vector<2x128xf32>
    %cst_83 = arith.constant dense<0.000000e+00> : vector<2x128xf32>
    %253 = tpu.matmul %250, %249, %cst_83 {dimension_numbers = #tpu.dot_dimension_numbers<[1], [0], [0], [1], [0, 0, 1, 1], [], []>} : vector<2x32xf32>, vector<32x128xf32>, vector<2x128xf32> -> vector<2x128xf32>
    %254 = arith.addf %252, %253 : vector<2x128xf32>
    %255 = vector.extract_strided_slice %254 {offsets = [0, 0], sizes = [2, 32], strides = [1, 1]} : vector<2x128xf32> to vector<2x32xf32>
    %256 = arith.negf %255 : vector<2x32xf32>
    %257 = math.exp %256 : vector<2x32xf32>
    %cst_84 = arith.constant 1.000000e+00 : f32
    %258 = vector.broadcast %cst_84 : f32 to vector<2x32xf32>
    %259 = arith.addf %258, %257 : vector<2x32xf32>
    %260 = arith.divf %258, %259 : vector<2x32xf32>
    %261 = vector.extract_strided_slice %254 {offsets = [0, 32], sizes = [2, 32], strides = [1, 1]} : vector<2x128xf32> to vector<2x32xf32>
    %262 = arith.negf %261 : vector<2x32xf32>
    %263 = math.exp %262 : vector<2x32xf32>
    %cst_85 = arith.constant 1.000000e+00 : f32
    %264 = vector.broadcast %cst_85 : f32 to vector<2x32xf32>
    %265 = arith.addf %264, %263 : vector<2x32xf32>
    %266 = arith.divf %264, %265 : vector<2x32xf32>
    %267 = vector.extract_strided_slice %254 {offsets = [0, 64], sizes = [2, 32], strides = [1, 1]} : vector<2x128xf32> to vector<2x32xf32>
    %268 = math.tanh %267 : vector<2x32xf32>
    %269 = vector.extract_strided_slice %254 {offsets = [0, 96], sizes = [2, 32], strides = [1, 1]} : vector<2x128xf32> to vector<2x32xf32>
    %270 = arith.negf %269 : vector<2x32xf32>
    %271 = math.exp %270 : vector<2x32xf32>
    %cst_86 = arith.constant 1.000000e+00 : f32
    %272 = vector.broadcast %cst_86 : f32 to vector<2x32xf32>
    %273 = arith.addf %272, %271 : vector<2x32xf32>
    %274 = arith.divf %272, %273 : vector<2x32xf32>
    %275 = arith.mulf %266, %251 : vector<2x32xf32>
    %276 = arith.mulf %260, %268 : vector<2x32xf32>
    %277 = arith.addf %275, %276 : vector<2x32xf32>
    %278 = math.tanh %277 : vector<2x32xf32>
    %279 = arith.mulf %274, %278 : vector<2x32xf32>
    %c2_87 = arith.constant 2 : index
    %c0_88 = arith.constant 0 : index
    %280 = vector.load %arg10[%c2_87, %c0_88] : memref<16x128xf32, #tpu.memory_space<vmem>>, vector<2x128xf32>
    %cst_89 = arith.constant dense<0.000000e+00> : vector<2x128xf32>
    %281 = tpu.matmul %279, %249, %cst_89 {dimension_numbers = #tpu.dot_dimension_numbers<[1], [0], [0], [1], [0, 0, 1, 1], [], []>} : vector<2x32xf32>, vector<32x128xf32>, vector<2x128xf32> -> vector<2x128xf32>
    %282 = arith.addf %280, %281 : vector<2x128xf32>
    %283 = vector.extract_strided_slice %282 {offsets = [0, 0], sizes = [2, 32], strides = [1, 1]} : vector<2x128xf32> to vector<2x32xf32>
    %284 = arith.negf %283 : vector<2x32xf32>
    %285 = math.exp %284 : vector<2x32xf32>
    %cst_90 = arith.constant 1.000000e+00 : f32
    %286 = vector.broadcast %cst_90 : f32 to vector<2x32xf32>
    %287 = arith.addf %286, %285 : vector<2x32xf32>
    %288 = arith.divf %286, %287 : vector<2x32xf32>
    %289 = vector.extract_strided_slice %282 {offsets = [0, 32], sizes = [2, 32], strides = [1, 1]} : vector<2x128xf32> to vector<2x32xf32>
    %290 = arith.negf %289 : vector<2x32xf32>
    %291 = math.exp %290 : vector<2x32xf32>
    %cst_91 = arith.constant 1.000000e+00 : f32
    %292 = vector.broadcast %cst_91 : f32 to vector<2x32xf32>
    %293 = arith.addf %292, %291 : vector<2x32xf32>
    %294 = arith.divf %292, %293 : vector<2x32xf32>
    %295 = vector.extract_strided_slice %282 {offsets = [0, 64], sizes = [2, 32], strides = [1, 1]} : vector<2x128xf32> to vector<2x32xf32>
    %296 = math.tanh %295 : vector<2x32xf32>
    %297 = vector.extract_strided_slice %282 {offsets = [0, 96], sizes = [2, 32], strides = [1, 1]} : vector<2x128xf32> to vector<2x32xf32>
    %298 = arith.negf %297 : vector<2x32xf32>
    %299 = math.exp %298 : vector<2x32xf32>
    %cst_92 = arith.constant 1.000000e+00 : f32
    %300 = vector.broadcast %cst_92 : f32 to vector<2x32xf32>
    %301 = arith.addf %300, %299 : vector<2x32xf32>
    %302 = arith.divf %300, %301 : vector<2x32xf32>
    %303 = arith.mulf %294, %277 : vector<2x32xf32>
    %304 = arith.mulf %288, %296 : vector<2x32xf32>
    %305 = arith.addf %303, %304 : vector<2x32xf32>
    %306 = math.tanh %305 : vector<2x32xf32>
    %307 = arith.mulf %302, %306 : vector<2x32xf32>
    %c4_93 = arith.constant 4 : index
    %c0_94 = arith.constant 0 : index
    %308 = vector.load %arg10[%c4_93, %c0_94] : memref<16x128xf32, #tpu.memory_space<vmem>>, vector<2x128xf32>
    %cst_95 = arith.constant dense<0.000000e+00> : vector<2x128xf32>
    %309 = tpu.matmul %307, %249, %cst_95 {dimension_numbers = #tpu.dot_dimension_numbers<[1], [0], [0], [1], [0, 0, 1, 1], [], []>} : vector<2x32xf32>, vector<32x128xf32>, vector<2x128xf32> -> vector<2x128xf32>
    %310 = arith.addf %308, %309 : vector<2x128xf32>
    %311 = vector.extract_strided_slice %310 {offsets = [0, 0], sizes = [2, 32], strides = [1, 1]} : vector<2x128xf32> to vector<2x32xf32>
    %312 = arith.negf %311 : vector<2x32xf32>
    %313 = math.exp %312 : vector<2x32xf32>
    %cst_96 = arith.constant 1.000000e+00 : f32
    %314 = vector.broadcast %cst_96 : f32 to vector<2x32xf32>
    %315 = arith.addf %314, %313 : vector<2x32xf32>
    %316 = arith.divf %314, %315 : vector<2x32xf32>
    %317 = vector.extract_strided_slice %310 {offsets = [0, 32], sizes = [2, 32], strides = [1, 1]} : vector<2x128xf32> to vector<2x32xf32>
    %318 = arith.negf %317 : vector<2x32xf32>
    %319 = math.exp %318 : vector<2x32xf32>
    %cst_97 = arith.constant 1.000000e+00 : f32
    %320 = vector.broadcast %cst_97 : f32 to vector<2x32xf32>
    %321 = arith.addf %320, %319 : vector<2x32xf32>
    %322 = arith.divf %320, %321 : vector<2x32xf32>
    %323 = vector.extract_strided_slice %310 {offsets = [0, 64], sizes = [2, 32], strides = [1, 1]} : vector<2x128xf32> to vector<2x32xf32>
    %324 = math.tanh %323 : vector<2x32xf32>
    %325 = vector.extract_strided_slice %310 {offsets = [0, 96], sizes = [2, 32], strides = [1, 1]} : vector<2x128xf32> to vector<2x32xf32>
    %326 = arith.negf %325 : vector<2x32xf32>
    %327 = math.exp %326 : vector<2x32xf32>
    %cst_98 = arith.constant 1.000000e+00 : f32
    %328 = vector.broadcast %cst_98 : f32 to vector<2x32xf32>
    %329 = arith.addf %328, %327 : vector<2x32xf32>
    %330 = arith.divf %328, %329 : vector<2x32xf32>
    %331 = arith.mulf %322, %305 : vector<2x32xf32>
    %332 = arith.mulf %316, %324 : vector<2x32xf32>
    %333 = arith.addf %331, %332 : vector<2x32xf32>
    %334 = math.tanh %333 : vector<2x32xf32>
    %335 = arith.mulf %330, %334 : vector<2x32xf32>
    %c6_99 = arith.constant 6 : index
    %c0_100 = arith.constant 0 : index
    %336 = vector.load %arg10[%c6_99, %c0_100] : memref<16x128xf32, #tpu.memory_space<vmem>>, vector<2x128xf32>
    %cst_101 = arith.constant dense<0.000000e+00> : vector<2x128xf32>
    %337 = tpu.matmul %335, %249, %cst_101 {dimension_numbers = #tpu.dot_dimension_numbers<[1], [0], [0], [1], [0, 0, 1, 1], [], []>} : vector<2x32xf32>, vector<32x128xf32>, vector<2x128xf32> -> vector<2x128xf32>
    %338 = arith.addf %336, %337 : vector<2x128xf32>
    %339 = vector.extract_strided_slice %338 {offsets = [0, 0], sizes = [2, 32], strides = [1, 1]} : vector<2x128xf32> to vector<2x32xf32>
    %340 = arith.negf %339 : vector<2x32xf32>
    %341 = math.exp %340 : vector<2x32xf32>
    %cst_102 = arith.constant 1.000000e+00 : f32
    %342 = vector.broadcast %cst_102 : f32 to vector<2x32xf32>
    %343 = arith.addf %342, %341 : vector<2x32xf32>
    %344 = arith.divf %342, %343 : vector<2x32xf32>
    %345 = vector.extract_strided_slice %338 {offsets = [0, 32], sizes = [2, 32], strides = [1, 1]} : vector<2x128xf32> to vector<2x32xf32>
    %346 = arith.negf %345 : vector<2x32xf32>
    %347 = math.exp %346 : vector<2x32xf32>
    %cst_103 = arith.constant 1.000000e+00 : f32
    %348 = vector.broadcast %cst_103 : f32 to vector<2x32xf32>
    %349 = arith.addf %348, %347 : vector<2x32xf32>
    %350 = arith.divf %348, %349 : vector<2x32xf32>
    %351 = vector.extract_strided_slice %338 {offsets = [0, 64], sizes = [2, 32], strides = [1, 1]} : vector<2x128xf32> to vector<2x32xf32>
    %352 = math.tanh %351 : vector<2x32xf32>
    %353 = vector.extract_strided_slice %338 {offsets = [0, 96], sizes = [2, 32], strides = [1, 1]} : vector<2x128xf32> to vector<2x32xf32>
    %354 = arith.negf %353 : vector<2x32xf32>
    %355 = math.exp %354 : vector<2x32xf32>
    %cst_104 = arith.constant 1.000000e+00 : f32
    %356 = vector.broadcast %cst_104 : f32 to vector<2x32xf32>
    %357 = arith.addf %356, %355 : vector<2x32xf32>
    %358 = arith.divf %356, %357 : vector<2x32xf32>
    %359 = arith.mulf %350, %333 : vector<2x32xf32>
    %360 = arith.mulf %344, %352 : vector<2x32xf32>
    %361 = arith.addf %359, %360 : vector<2x32xf32>
    %362 = math.tanh %361 : vector<2x32xf32>
    %363 = arith.mulf %358, %362 : vector<2x32xf32>
    %c8_105 = arith.constant 8 : index
    %c0_106 = arith.constant 0 : index
    %364 = vector.load %arg10[%c8_105, %c0_106] : memref<16x128xf32, #tpu.memory_space<vmem>>, vector<2x128xf32>
    %cst_107 = arith.constant dense<0.000000e+00> : vector<2x128xf32>
    %365 = tpu.matmul %363, %249, %cst_107 {dimension_numbers = #tpu.dot_dimension_numbers<[1], [0], [0], [1], [0, 0, 1, 1], [], []>} : vector<2x32xf32>, vector<32x128xf32>, vector<2x128xf32> -> vector<2x128xf32>
    %366 = arith.addf %364, %365 : vector<2x128xf32>
    %367 = vector.extract_strided_slice %366 {offsets = [0, 0], sizes = [2, 32], strides = [1, 1]} : vector<2x128xf32> to vector<2x32xf32>
    %368 = arith.negf %367 : vector<2x32xf32>
    %369 = math.exp %368 : vector<2x32xf32>
    %cst_108 = arith.constant 1.000000e+00 : f32
    %370 = vector.broadcast %cst_108 : f32 to vector<2x32xf32>
    %371 = arith.addf %370, %369 : vector<2x32xf32>
    %372 = arith.divf %370, %371 : vector<2x32xf32>
    %373 = vector.extract_strided_slice %366 {offsets = [0, 32], sizes = [2, 32], strides = [1, 1]} : vector<2x128xf32> to vector<2x32xf32>
    %374 = arith.negf %373 : vector<2x32xf32>
    %375 = math.exp %374 : vector<2x32xf32>
    %cst_109 = arith.constant 1.000000e+00 : f32
    %376 = vector.broadcast %cst_109 : f32 to vector<2x32xf32>
    %377 = arith.addf %376, %375 : vector<2x32xf32>
    %378 = arith.divf %376, %377 : vector<2x32xf32>
    %379 = vector.extract_strided_slice %366 {offsets = [0, 64], sizes = [2, 32], strides = [1, 1]} : vector<2x128xf32> to vector<2x32xf32>
    %380 = math.tanh %379 : vector<2x32xf32>
    %381 = vector.extract_strided_slice %366 {offsets = [0, 96], sizes = [2, 32], strides = [1, 1]} : vector<2x128xf32> to vector<2x32xf32>
    %382 = arith.negf %381 : vector<2x32xf32>
    %383 = math.exp %382 : vector<2x32xf32>
    %cst_110 = arith.constant 1.000000e+00 : f32
    %384 = vector.broadcast %cst_110 : f32 to vector<2x32xf32>
    %385 = arith.addf %384, %383 : vector<2x32xf32>
    %386 = arith.divf %384, %385 : vector<2x32xf32>
    %387 = arith.mulf %378, %361 : vector<2x32xf32>
    %388 = arith.mulf %372, %380 : vector<2x32xf32>
    %389 = arith.addf %387, %388 : vector<2x32xf32>
    %390 = math.tanh %389 : vector<2x32xf32>
    %391 = arith.mulf %386, %390 : vector<2x32xf32>
    %c10_111 = arith.constant 10 : index
    %c0_112 = arith.constant 0 : index
    %392 = vector.load %arg10[%c10_111, %c0_112] : memref<16x128xf32, #tpu.memory_space<vmem>>, vector<2x128xf32>
    %cst_113 = arith.constant dense<0.000000e+00> : vector<2x128xf32>
    %393 = tpu.matmul %391, %249, %cst_113 {dimension_numbers = #tpu.dot_dimension_numbers<[1], [0], [0], [1], [0, 0, 1, 1], [], []>} : vector<2x32xf32>, vector<32x128xf32>, vector<2x128xf32> -> vector<2x128xf32>
    %394 = arith.addf %392, %393 : vector<2x128xf32>
    %395 = vector.extract_strided_slice %394 {offsets = [0, 0], sizes = [2, 32], strides = [1, 1]} : vector<2x128xf32> to vector<2x32xf32>
    %396 = arith.negf %395 : vector<2x32xf32>
    %397 = math.exp %396 : vector<2x32xf32>
    %cst_114 = arith.constant 1.000000e+00 : f32
    %398 = vector.broadcast %cst_114 : f32 to vector<2x32xf32>
    %399 = arith.addf %398, %397 : vector<2x32xf32>
    %400 = arith.divf %398, %399 : vector<2x32xf32>
    %401 = vector.extract_strided_slice %394 {offsets = [0, 32], sizes = [2, 32], strides = [1, 1]} : vector<2x128xf32> to vector<2x32xf32>
    %402 = arith.negf %401 : vector<2x32xf32>
    %403 = math.exp %402 : vector<2x32xf32>
    %cst_115 = arith.constant 1.000000e+00 : f32
    %404 = vector.broadcast %cst_115 : f32 to vector<2x32xf32>
    %405 = arith.addf %404, %403 : vector<2x32xf32>
    %406 = arith.divf %404, %405 : vector<2x32xf32>
    %407 = vector.extract_strided_slice %394 {offsets = [0, 64], sizes = [2, 32], strides = [1, 1]} : vector<2x128xf32> to vector<2x32xf32>
    %408 = math.tanh %407 : vector<2x32xf32>
    %409 = vector.extract_strided_slice %394 {offsets = [0, 96], sizes = [2, 32], strides = [1, 1]} : vector<2x128xf32> to vector<2x32xf32>
    %410 = arith.negf %409 : vector<2x32xf32>
    %411 = math.exp %410 : vector<2x32xf32>
    %cst_116 = arith.constant 1.000000e+00 : f32
    %412 = vector.broadcast %cst_116 : f32 to vector<2x32xf32>
    %413 = arith.addf %412, %411 : vector<2x32xf32>
    %414 = arith.divf %412, %413 : vector<2x32xf32>
    %415 = arith.mulf %406, %389 : vector<2x32xf32>
    %416 = arith.mulf %400, %408 : vector<2x32xf32>
    %417 = arith.addf %415, %416 : vector<2x32xf32>
    %418 = math.tanh %417 : vector<2x32xf32>
    %419 = arith.mulf %414, %418 : vector<2x32xf32>
    %c12_117 = arith.constant 12 : index
    %c0_118 = arith.constant 0 : index
    %420 = vector.load %arg10[%c12_117, %c0_118] : memref<16x128xf32, #tpu.memory_space<vmem>>, vector<2x128xf32>
    %cst_119 = arith.constant dense<0.000000e+00> : vector<2x128xf32>
    %421 = tpu.matmul %419, %249, %cst_119 {dimension_numbers = #tpu.dot_dimension_numbers<[1], [0], [0], [1], [0, 0, 1, 1], [], []>} : vector<2x32xf32>, vector<32x128xf32>, vector<2x128xf32> -> vector<2x128xf32>
    %422 = arith.addf %420, %421 : vector<2x128xf32>
    %423 = vector.extract_strided_slice %422 {offsets = [0, 0], sizes = [2, 32], strides = [1, 1]} : vector<2x128xf32> to vector<2x32xf32>
    %424 = arith.negf %423 : vector<2x32xf32>
    %425 = math.exp %424 : vector<2x32xf32>
    %cst_120 = arith.constant 1.000000e+00 : f32
    %426 = vector.broadcast %cst_120 : f32 to vector<2x32xf32>
    %427 = arith.addf %426, %425 : vector<2x32xf32>
    %428 = arith.divf %426, %427 : vector<2x32xf32>
    %429 = vector.extract_strided_slice %422 {offsets = [0, 32], sizes = [2, 32], strides = [1, 1]} : vector<2x128xf32> to vector<2x32xf32>
    %430 = arith.negf %429 : vector<2x32xf32>
    %431 = math.exp %430 : vector<2x32xf32>
    %cst_121 = arith.constant 1.000000e+00 : f32
    %432 = vector.broadcast %cst_121 : f32 to vector<2x32xf32>
    %433 = arith.addf %432, %431 : vector<2x32xf32>
    %434 = arith.divf %432, %433 : vector<2x32xf32>
    %435 = vector.extract_strided_slice %422 {offsets = [0, 64], sizes = [2, 32], strides = [1, 1]} : vector<2x128xf32> to vector<2x32xf32>
    %436 = math.tanh %435 : vector<2x32xf32>
    %437 = vector.extract_strided_slice %422 {offsets = [0, 96], sizes = [2, 32], strides = [1, 1]} : vector<2x128xf32> to vector<2x32xf32>
    %438 = arith.negf %437 : vector<2x32xf32>
    %439 = math.exp %438 : vector<2x32xf32>
    %cst_122 = arith.constant 1.000000e+00 : f32
    %440 = vector.broadcast %cst_122 : f32 to vector<2x32xf32>
    %441 = arith.addf %440, %439 : vector<2x32xf32>
    %442 = arith.divf %440, %441 : vector<2x32xf32>
    %443 = arith.mulf %434, %417 : vector<2x32xf32>
    %444 = arith.mulf %428, %436 : vector<2x32xf32>
    %445 = arith.addf %443, %444 : vector<2x32xf32>
    %446 = math.tanh %445 : vector<2x32xf32>
    %447 = arith.mulf %442, %446 : vector<2x32xf32>
    %c14_123 = arith.constant 14 : index
    %c0_124 = arith.constant 0 : index
    %448 = vector.load %arg10[%c14_123, %c0_124] : memref<16x128xf32, #tpu.memory_space<vmem>>, vector<2x128xf32>
    %cst_125 = arith.constant dense<0.000000e+00> : vector<2x128xf32>
    %449 = tpu.matmul %447, %249, %cst_125 {dimension_numbers = #tpu.dot_dimension_numbers<[1], [0], [0], [1], [0, 0, 1, 1], [], []>} : vector<2x32xf32>, vector<32x128xf32>, vector<2x128xf32> -> vector<2x128xf32>
    %450 = arith.addf %448, %449 : vector<2x128xf32>
    %451 = vector.extract_strided_slice %450 {offsets = [0, 0], sizes = [2, 32], strides = [1, 1]} : vector<2x128xf32> to vector<2x32xf32>
    %452 = arith.negf %451 : vector<2x32xf32>
    %453 = math.exp %452 : vector<2x32xf32>
    %cst_126 = arith.constant 1.000000e+00 : f32
    %454 = vector.broadcast %cst_126 : f32 to vector<2x32xf32>
    %455 = arith.addf %454, %453 : vector<2x32xf32>
    %456 = arith.divf %454, %455 : vector<2x32xf32>
    %457 = vector.extract_strided_slice %450 {offsets = [0, 32], sizes = [2, 32], strides = [1, 1]} : vector<2x128xf32> to vector<2x32xf32>
    %458 = arith.negf %457 : vector<2x32xf32>
    %459 = math.exp %458 : vector<2x32xf32>
    %cst_127 = arith.constant 1.000000e+00 : f32
    %460 = vector.broadcast %cst_127 : f32 to vector<2x32xf32>
    %461 = arith.addf %460, %459 : vector<2x32xf32>
    %462 = arith.divf %460, %461 : vector<2x32xf32>
    %463 = vector.extract_strided_slice %450 {offsets = [0, 64], sizes = [2, 32], strides = [1, 1]} : vector<2x128xf32> to vector<2x32xf32>
    %464 = math.tanh %463 : vector<2x32xf32>
    %465 = vector.extract_strided_slice %450 {offsets = [0, 96], sizes = [2, 32], strides = [1, 1]} : vector<2x128xf32> to vector<2x32xf32>
    %466 = arith.negf %465 : vector<2x32xf32>
    %467 = math.exp %466 : vector<2x32xf32>
    %cst_128 = arith.constant 1.000000e+00 : f32
    %468 = vector.broadcast %cst_128 : f32 to vector<2x32xf32>
    %469 = arith.addf %468, %467 : vector<2x32xf32>
    %470 = arith.divf %468, %469 : vector<2x32xf32>
    %471 = arith.mulf %462, %445 : vector<2x32xf32>
    %472 = arith.mulf %456, %464 : vector<2x32xf32>
    %473 = arith.addf %471, %472 : vector<2x32xf32>
    %474 = math.tanh %473 : vector<2x32xf32>
    %475 = arith.mulf %470, %474 : vector<2x32xf32>
    %c0_129 = arith.constant 0 : index
    %c0_130 = arith.constant 0 : index
    %476 = vector.load %arg7[%c0_129, %c0_130] : memref<32x4xf32, #tpu.memory_space<vmem>>, vector<32x4xf32>
    %cst_131 = arith.constant dense<0.000000e+00> : vector<2x4xf32>
    %477 = tpu.matmul %475, %476, %cst_131 {dimension_numbers = #tpu.dot_dimension_numbers<[1], [0], [0], [1], [0, 0, 1, 1], [], []>} : vector<2x32xf32>, vector<32x4xf32>, vector<2x4xf32> -> vector<2x4xf32>
    %c0_132 = arith.constant 0 : index
    %c0_133 = arith.constant 0 : index
    %478 = vector.load %arg8[%c0_132, %c0_133] : memref<1x4xf32, #tpu.memory_space<vmem>>, vector<1x4xf32>
    %479 = vector.broadcast %478 : vector<1x4xf32> to vector<2x4xf32>
    %480 = arith.addf %477, %479 : vector<2x4xf32>
    %c0_134 = arith.constant 0 : index
    %c0_135 = arith.constant 0 : index
    %481 = vector.load %arg9[%c0_134, %c0_135] : memref<2x4xf32, #tpu.memory_space<vmem>>, vector<2x4xf32>
    tpu.vector_store %arg9[%c0_134, %c0_135], %480 {strides = array<i32>} : memref<2x4xf32, #tpu.memory_space<vmem>>, vector<2x4xf32>,
    return
  }
}

</mosaic_0001>

<llo_original>
// kernel: lstm_model_forward.1
$region0: #{lstm_model_forward.1}
  #allocation0 [shape = 'u32[]', space=smem, size = 0x4, offset = 0x4, fixed_abs, tag = 'smem constant byte address 0x4 - core index']
  #allocation1 [shape = 'u32[144,128]{1,0:T(1,128)}', space=vmem, size = 0x12000, scoped, tag = 'internal scratch']
  #allocation2 [shape = 'f32[16,128]{1,0:T(8,128)}', space=vmem, size = 0x2000, scoped, tag = 'scratch operand']
  #allocation3 [shape = 'f32[16,32]{1,0:T(8,128)}', space=vmem, size = 0x2000, scoped, tag = 'scratch operand']
  %s0 = inlined_call_operand.vmem [shape: f32[16,8], index: 0, kind: input, shape index: {}]
  %s1 = inlined_call_operand.hbm [shape: f32[8,128], index: 1, kind: input, shape index: {}]
  %s2 = inlined_call_operand.vmem [shape: f32[32,128], index: 2, kind: input, shape index: {}]
  %s3 = inlined_call_operand.vmem [shape: f32[1,128], index: 3, kind: input, shape index: {}]
  %s4 = inlined_call_operand.vmem [shape: f32[32,128], index: 4, kind: input, shape index: {}]
  %s5 = inlined_call_operand.vmem [shape: f32[32,128], index: 5, kind: input, shape index: {}]
  %s6 = inlined_call_operand.vmem [shape: f32[1,128], index: 6, kind: input, shape index: {}]
  %s7 = inlined_call_operand.vmem [shape: f32[32,4], index: 7, kind: input, shape index: {}]
  %s8 = inlined_call_operand.hbm [shape: f32[1,4], index: 8, kind: input, shape index: {}]
  %s9 = inlined_call_operand.hbm [shape: f32[2,4], index: 9, kind: output, shape index: {}]
  %s10 = sld [smem:[#allocation0]]
  $region54: #{lstm_model_forward.1} parent=0
    _
  %s12 = ssub.s32 1, %s10
  %s13 = scalar_select 0, %s12, %s10
  $region1: #{lstm_model_forward.1} parent=0
    #allocation4 [shape = 'u8[4096]{0}', space=vmem, size = 0x1000, scoped, tag = 'input window, operand 1, single buffered']
    #allocation5 [shape = 's32[1]{0}', space=sflag, size = 0x4, scoped, tag = 'scoped memory for lstm_model_forward.1']
    #allocation6 [shape = 's32[1]{0}', space=sflag, size = 0x4, scoped, tag = 'scoped memory for lstm_model_forward.1']
    #allocation7 [shape = 'u8[512]{0}', space=vmem, size = 0x400, scoped, tag = 'input window, operand 8, single buffered']
    #allocation8 [shape = 's32[1]{0}', space=sflag, size = 0x4, scoped, tag = 'scoped memory for lstm_model_forward.1']
    #allocation9 [shape = 'u8[1024]{0}', space=vmem, size = 0x400, scoped, tag = 'output window, operand 0, single buffered']
    %14 = vsyncpa [#allocation5], 0
    %15 = vsyncpa [#allocation8], 0
    %16 = vsyncpa [#allocation6], 0
    // Predicated region
    $region2: #{lstm_model_forward.1} parent=1 // pred_check
      _
    $region3: #{lstm_model_forward.1} parent=1 // pred_check_branch
      %18 = sbr.rel (0) target = $region5
    $region4: #{lstm_model_forward.1} parent=1 // pred_region
      _
    $region5: #{lstm_model_forward.1} parent=1 // pred_fallthru
      _
    // Predicated region
    $region6: #{lstm_model_forward.1} parent=1 // pred_check
      _
    $region7: #{lstm_model_forward.1} parent=1 // pred_check_branch
      %20 = sbr.rel (0) target = $region9
    $region8: #{lstm_model_forward.1} parent=1 // pred_region
      %s22 = ssub.s32 128, 128
      %23 = vsyncadd [#allocation5], %s22
      %s25 = sshll.u32 [#allocation4], 4
      %s26 = int_to_ptr.vmem [resolvable:$true] %s25
      %28 = dma.hbm_to_vmem [thread:$0]  %s1, 128, %s26, [#allocation5]
    $region9: #{lstm_model_forward.1} parent=1 // pred_fallthru
      _
    // Predicated region
    $region10: #{lstm_model_forward.1} parent=1 // pred_check
      _
    $region11: #{lstm_model_forward.1} parent=1 // pred_check_branch
      %30 = sbr.rel (0) target = $region13
    $region12: #{lstm_model_forward.1} parent=1 // pred_region
      _
    $region13: #{lstm_model_forward.1} parent=1 // pred_fallthru
      _
    // Predicated region
    $region14: #{lstm_model_forward.1} parent=1 // pred_check
      _
    $region15: #{lstm_model_forward.1} parent=1 // pred_check_branch
      %32 = sbr.rel (0) target = $region17
    $region16: #{lstm_model_forward.1} parent=1 // pred_region
      _
    $region17: #{lstm_model_forward.1} parent=1 // pred_fallthru
      _
    // Predicated region
    $region18: #{lstm_model_forward.1} parent=1 // pred_check
      _
    $region19: #{lstm_model_forward.1} parent=1 // pred_check_branch
      %34 = sbr.rel (0) target = $region21
    $region20: #{lstm_model_forward.1} parent=1 // pred_region
      _
    $region21: #{lstm_model_forward.1} parent=1 // pred_fallthru
      _
    // Predicated region
    $region22: #{lstm_model_forward.1} parent=1 // pred_check
      _
    $region23: #{lstm_model_forward.1} parent=1 // pred_check_branch
      %36 = sbr.rel (0) target = $region25
    $region24: #{lstm_model_forward.1} parent=1 // pred_region
      _
    $region25: #{lstm_model_forward.1} parent=1 // pred_fallthru
      _
    // Predicated region
    $region26: #{lstm_model_forward.1} parent=1 // pred_check
      _
    $region27: #{lstm_model_forward.1} parent=1 // pred_check_branch
      %38 = sbr.rel (0) target = $region29
    $region28: #{lstm_model_forward.1} parent=1 // pred_region
      _
    $region29: #{lstm_model_forward.1} parent=1 // pred_fallthru
      _
    // Predicated region
    $region30: #{lstm_model_forward.1} parent=1 // pred_check
      _
    $region31: #{lstm_model_forward.1} parent=1 // pred_check_branch
      %40 = sbr.rel (0) target = $region33
    $region32: #{lstm_model_forward.1} parent=1 // pred_region
      _
    $region33: #{lstm_model_forward.1} parent=1 // pred_fallthru
      _
    // Predicated region
    $region34: #{lstm_model_forward.1} parent=1 // pred_check
      _
    $region35: #{lstm_model_forward.1} parent=1 // pred_check_branch
      %42 = sbr.rel (0) target = $region37
    $region36: #{lstm_model_forward.1} parent=1 // pred_region
      %s44 = ssub.s32 16, 16
      %45 = vsyncadd [#allocation8], %s44
      %s47 = sshll.u32 [#allocation7], 4
      %s48 = int_to_ptr.vmem [resolvable:$true] %s47
      %50 = dma.hbm_to_vmem [thread:$0]  %s8, 16, %s48, [#allocation8]
    $region37: #{lstm_model_forward.1} parent=1 // pred_fallthru
      _
    // Predicated region
    $region38: #{lstm_model_forward.1} parent=1 // pred_check
      _
    $region39: #{lstm_model_forward.1} parent=1 // pred_check_branch
      %52 = sbr.rel (0) target = $region41
    $region40: #{lstm_model_forward.1} parent=1 // pred_region
      %53 = dma.done [#allocation5], 128
    $region41: #{lstm_model_forward.1} parent=1 // pred_fallthru
      _
    // Predicated region
    $region42: #{lstm_model_forward.1} parent=1 // pred_check
      _
    $region43: #{lstm_model_forward.1} parent=1 // pred_check_branch
      %55 = sbr.rel (0) target = $region45
    $region44: #{lstm_model_forward.1} parent=1 // pred_region
      %56 = dma.done [#allocation8], 16
    $region45: #{lstm_model_forward.1} parent=1 // pred_fallthru
      _
    %v57 = vld [vmem:[%s0] sm:$0xff]
    %v58 = vld [vmem:[%s0 + $0x8] sm:$0xff]
    %v59 = vld [vmem:[#allocation4] sm:$0xff]
    %v60 = vld [vmem:[%s3] sm:$0x1]
    %v62 = vlaneseq
    %v63 = vshrl.u32 %v62, 7
    %v64 = vsub.s32 0, %v63
    %v65 = vrot.slane %v60, %v64
    %vm67 = vcmask 64512
    %v69 = vsel %vm67, %v57, 0
    %v72 = vsel %vm67, %v58, 0
    %74 = vmatprep.subr.mxu0 0.0
    %75 = vmatpush1.msra.mxu0 %v59
    %76 = vmatprep.subr.mxu0 0.0
    %77 = vmatpush1.msra.mxu0 0.0
    %78 = vmatprep.subr.mxu0 0.0
    %79 = vmatpush1.msra.mxu0 0.0
    %80 = vmatprep.subr.mxu0 0.0
    %81 = vmatpush1.msra.mxu0 0.0
    %82 = vmatprep.subr.mxu0 0.0
    %83 = vmatpush1.msra.mxu0 0.0
    %84 = vmatprep.subr.mxu0 0.0
    %85 = vmatpush1.msra.mxu0 0.0
    %86 = vmatprep.subr.mxu0 0.0
    %87 = vmatpush1.msra.mxu0 0.0
    %88 = vmatprep.subr.mxu0 0.0
    %89 = vmatpush1.msra.mxu0 0.0
    %90 = vmatprep.subr.mxu0 0.0
    %91 = vmatpush1.msra.mxu0 0.0
    %92 = vmatprep.subr.mxu0 0.0
    %93 = vmatpush1.msra.mxu0 0.0
    %94 = vmatprep.subr.mxu0 0.0
    %95 = vmatpush1.msra.mxu0 0.0
    %96 = vmatprep.subr.mxu0 0.0
    %97 = vmatpush1.msra.mxu0 0.0
    %98 = vmatprep.subr.mxu0 0.0
    %99 = vmatpush1.msra.mxu0 0.0
    %100 = vmatprep.subr.mxu0 0.0
    %101 = vmatpush1.msra.mxu0 0.0
    %102 = vmatprep.subr.mxu0 0.0
    %103 = vmatpush1.msra.mxu0 0.0
    %104 = vmatprep.subr.mxu0 0.0
    %105 = vmatpush1.msra.mxu0 0.0
    %106 = vmatprep.subr.mxu0 0.0
    %107 = vmatpush1.msra.mxu0 0.0
    %108 = vmatprep.subr.mxu0 0.0
    %109 = vmatpush1.msra.mxu0 0.0
    %110 = vmatprep.subr.mxu0 0.0
    %111 = vmatpush1.msra.mxu0 0.0
    %112 = vmatprep.subr.mxu0 0.0
    %113 = vmatpush1.msra.mxu0 0.0
    %114 = vmatprep.subr.mxu0 0.0
    %115 = vmatpush1.msra.mxu0 0.0
    %116 = vmatprep.subr.mxu0 0.0
    %117 = vmatpush1.msra.mxu0 0.0
    %118 = vmatprep.subr.mxu0 0.0
    %119 = vmatpush1.msra.mxu0 0.0
    %120 = vmatprep.subr.mxu0 0.0
    %121 = vmatpush1.msra.mxu0 0.0
    %122 = vmatprep.subr.mxu0 0.0
    %123 = vmatpush1.msra.mxu0 0.0
    %124 = vmatprep.subr.mxu0 0.0
    %125 = vmatpush1.msra.mxu0 0.0
    %126 = vmatprep.subr.mxu0 0.0
    %127 = vmatpush1.msra.mxu0 0.0
    %128 = vmatprep.subr.mxu0 0.0
    %129 = vmatpush1.msra.mxu0 0.0
    %130 = vmatprep.subr.mxu0 0.0
    %131 = vmatpush1.msra.mxu0 0.0
    %132 = vmatprep.subr.mxu0 0.0
    %133 = vmatpush1.msra.mxu0 0.0
    %134 = vmatprep.subr.mxu0 0.0
    %135 = vmatpush1.msra.mxu0 0.0
    %136 = vmatprep.subr.mxu0 0.0
    %137 = vmatpush1.msra.mxu0 0.0
    %138 = vmatprep.mubr.f32.mxu0 0.0
    %139 = vmatmul.mubr.f32.gmra.mrb[0].mxu0 %v69
    %v140 = vpop.f32.mrb[0].mxu0
    %v141 = vadd.f32 %v65, %v140
    %v142 = vpop.f32.mrb[0].mxu0
    %143 = vmatprep.mubr.f32.mxu0 0.0
    %144 = vmatmul.mubr.f32.gmra.mrb[0].mxu0 %v72
    %v145 = vpop.f32.mrb[0].mxu0
    %v146 = vadd.f32 %v65, %v145
    %v147 = vpop.f32.mrb[0].mxu0
    %148 = vdwg.mxu0
    %149 = vst [vmem:[#allocation2] sm:$0xff] %v141
    %150 = vst [vmem:[#allocation2 + $0x8] sm:$0xff] %v146
    %v151 = vld [vmem:[%s2] sm:$0xff]
    %v152 = vld [vmem:[%s2 + $0x8] sm:$0xff]
    %v153 = vld [vmem:[%s2 + $0x10] sm:$0xff]
    %v154 = vld [vmem:[%s2 + $0x18] sm:$0xff]
    %v155 = vld [vmem:[#allocation2] sm:$0x3]
    %vm156 = vcmask 261120
    %v158 = vsel %vm156, 0.0, 0
    %160 = vmatprep.subr.mxu0 0.0
    %161 = vmatpush1.msra.mxu0 %v151
    %162 = vmatprep.subr.mxu0 0.0
    %163 = vmatpush1.msra.mxu0 %v152
    %164 = vmatprep.subr.mxu0 0.0
    %165 = vmatpush1.msra.mxu0 %v153
    %166 = vmatprep.subr.mxu0 0.0
    %167 = vmatpush1.msra.mxu0 %v154
    %168 = vmatprep.subr.mxu0 0.0
    %169 = vmatpush1.msra.mxu0 0.0
    %170 = vmatprep.subr.mxu0 0.0
    %171 = vmatpush1.msra.mxu0 0.0
    %172 = vmatprep.subr.mxu0 0.0
    %173 = vmatpush1.msra.mxu0 0.0
    %174 = vmatprep.subr.mxu0 0.0
    %175 = vmatpush1.msra.mxu0 0.0
    %176 = vmatprep.subr.mxu0 0.0
    %177 = vmatpush1.msra.mxu0 0.0
    %178 = vmatprep.subr.mxu0 0.0
    %179 = vmatpush1.msra.mxu0 0.0
    %180 = vmatprep.subr.mxu0 0.0
    %181 = vmatpush1.msra.mxu0 0.0
    %182 = vmatprep.subr.mxu0 0.0
    %183 = vmatpush1.msra.mxu0 0.0
    %184 = vmatprep.subr.mxu0 0.0
    %185 = vmatpush1.msra.mxu0 0.0
    %186 = vmatprep.subr.mxu0 0.0
    %187 = vmatpush1.msra.mxu0 0.0
    %188 = vmatprep.subr.mxu0 0.0
    %189 = vmatpush1.msra.mxu0 0.0
    %190 = vmatprep.subr.mxu0 0.0
    %191 = vmatpush1.msra.mxu0 0.0
    %192 = vmatprep.subr.mxu0 0.0
    %193 = vmatpush1.msra.mxu0 0.0
    %194 = vmatprep.subr.mxu0 0.0
    %195 = vmatpush1.msra.mxu0 0.0
    %196 = vmatprep.subr.mxu0 0.0
    %197 = vmatpush1.msra.mxu0 0.0
    %198 = vmatprep.subr.mxu0 0.0
    %199 = vmatpush1.msra.mxu0 0.0
    %200 = vmatprep.subr.mxu0 0.0
    %201 = vmatpush1.msra.mxu0 0.0
    %202 = vmatprep.subr.mxu0 0.0
    %203 = vmatpush1.msra.mxu0 0.0
    %204 = vmatprep.subr.mxu0 0.0
    %205 = vmatpush1.msra.mxu0 0.0
    %206 = vmatprep.subr.mxu0 0.0
    %207 = vmatpush1.msra.mxu0 0.0
    %208 = vmatprep.subr.mxu0 0.0
    %209 = vmatpush1.msra.mxu0 0.0
    %210 = vmatprep.subr.mxu0 0.0
    %211 = vmatpush1.msra.mxu0 0.0
    %212 = vmatprep.subr.mxu0 0.0
    %213 = vmatpush1.msra.mxu0 0.0
    %214 = vmatprep.subr.mxu0 0.0
    %215 = vmatpush1.msra.mxu0 0.0
    %216 = vmatprep.subr.mxu0 0.0
    %217 = vmatpush1.msra.mxu0 0.0
    %218 = vmatprep.subr.mxu0 0.0
    %219 = vmatpush1.msra.mxu0 0.0
    %220 = vmatprep.subr.mxu0 0.0
    %221 = vmatpush1.msra.mxu0 0.0
    %222 = vmatprep.subr.mxu0 0.0
    %223 = vmatpush1.msra.mxu0 0.0
    %224 = vmatprep.mubr.f32.mxu0 0.0
    %225 = vmatmul.mubr.f32.gmra.mrb[0].mxu0 %v158
    %v226 = vpop.f32.mrb[0].mxu0
    %v227 = vadd.f32 0.0, %v226
    %v228 = vpop.f32.mrb[0].mxu0
    %229 = vdwg.mxu0
    %v230 = vadd.f32 %v155, %v227
    %v231 = vxor.u32 %v230, 2147483648
    %v232 = vmul.f32 %v231, 1.442695
    %v233 = vpow.pop %v232
    %v234 = vadd.f32 %v233, 1.0
    %v235 = vrcp.pop %v234
    %v236 = vmul.f32 1.0, %v235
    %v237 = vtanh.pop %v230
    %v238 = vmul.f32 %v236, 0.0
    %240 = vrot.lane.b32.xlu0 %v237, 64
    %v241 = vpop.permute.xlu0 %240
    %v243 = vmul.f32 %v236, %v241
    %245 = vrot.lane.b32.xlu0 %v243, 32
    %v246 = vpop.permute.xlu0 %245
    %v248 = vadd.f32 %v238, %v246
    %v249 = vtanh.pop %v248
    %251 = vrot.lane.b32.xlu0 %v249, 64
    %v252 = vpop.permute.xlu0 %251
    %v254 = vmul.f32 %v236, %v252
    %256 = vrot.lane.b32.xlu0 %v254, 32
    %v257 = vpop.permute.xlu0 %256
    %vm259 = vcmask 254976
    %260 = vst.msk [vmem:[#allocation3] sm:$0x3] %vm259, %v257
    %v261 = vld [vmem:[#allocation2 + $0x2] sm:$0x3]
    %v262 = vsel %vm156, %v257, 0
    %264 = vmatprep.subr.mxu0 0.0
    %265 = vmatpush1.msra.mxu0 %v151
    %266 = vmatprep.subr.mxu0 0.0
    %267 = vmatpush1.msra.mxu0 %v152
    %268 = vmatprep.subr.mxu0 0.0
    %269 = vmatpush1.msra.mxu0 %v153
    %270 = vmatprep.subr.mxu0 0.0
    %271 = vmatpush1.msra.mxu0 %v154
    %272 = vmatprep.subr.mxu0 0.0
    %273 = vmatpush1.msra.mxu0 0.0
    %274 = vmatprep.subr.mxu0 0.0
    %275 = vmatpush1.msra.mxu0 0.0
    %276 = vmatprep.subr.mxu0 0.0
    %277 = vmatpush1.msra.mxu0 0.0
    %278 = vmatprep.subr.mxu0 0.0
    %279 = vmatpush1.msra.mxu0 0.0
    %280 = vmatprep.subr.mxu0 0.0
    %281 = vmatpush1.msra.mxu0 0.0
    %282 = vmatprep.subr.mxu0 0.0
    %283 = vmatpush1.msra.mxu0 0.0
    %284 = vmatprep.subr.mxu0 0.0
    %285 = vmatpush1.msra.mxu0 0.0
    %286 = vmatprep.subr.mxu0 0.0
    %287 = vmatpush1.msra.mxu0 0.0
    %288 = vmatprep.subr.mxu0 0.0
    %289 = vmatpush1.msra.mxu0 0.0
    %290 = vmatprep.subr.mxu0 0.0
    %291 = vmatpush1.msra.mxu0 0.0
    %292 = vmatprep.subr.mxu0 0.0
    %293 = vmatpush1.msra.mxu0 0.0
    %294 = vmatprep.subr.mxu0 0.0
    %295 = vmatpush1.msra.mxu0 0.0
    %296 = vmatprep.subr.mxu0 0.0
    %297 = vmatpush1.msra.mxu0 0.0
    %298 = vmatprep.subr.mxu0 0.0
    %299 = vmatpush1.msra.mxu0 0.0
    %300 = vmatprep.subr.mxu0 0.0
    %301 = vmatpush1.msra.mxu0 0.0
    %302 = vmatprep.subr.mxu0 0.0
    %303 = vmatpush1.msra.mxu0 0.0
    %304 = vmatprep.subr.mxu0 0.0
    %305 = vmatpush1.msra.mxu0 0.0
    %306 = vmatprep.subr.mxu0 0.0
    %307 = vmatpush1.msra.mxu0 0.0
    %308 = vmatprep.subr.mxu0 0.0
    %309 = vmatpush1.msra.mxu0 0.0
    %310 = vmatprep.subr.mxu0 0.0
    %311 = vmatpush1.msra.mxu0 0.0
    %312 = vmatprep.subr.mxu0 0.0
    %313 = vmatpush1.msra.mxu0 0.0
    %314 = vmatprep.subr.mxu0 0.0
    %315 = vmatpush1.msra.mxu0 0.0
    %316 = vmatprep.subr.mxu0 0.0
    %317 = vmatpush1.msra.mxu0 0.0
    %318 = vmatprep.subr.mxu0 0.0
    %319 = vmatpush1.msra.mxu0 0.0
    %320 = vmatprep.subr.mxu0 0.0
    %321 = vmatpush1.msra.mxu0 0.0
    %322 = vmatprep.subr.mxu0 0.0
    %323 = vmatpush1.msra.mxu0 0.0
    %324 = vmatprep.subr.mxu0 0.0
    %325 = vmatpush1.msra.mxu0 0.0
    %326 = vmatprep.subr.mxu0 0.0
    %327 = vmatpush1.msra.mxu0 0.0
    %328 = vmatprep.mubr.f32.mxu0 0.0
    %329 = vmatmul.mubr.f32.gmra.mrb[0].mxu0 %v262
    %v330 = vpop.f32.mrb[0].mxu0
    %v331 = vadd.f32 0.0, %v330
    %v332 = vpop.f32.mrb[0].mxu0
    %333 = vdwg.mxu0
    %v334 = vadd.f32 %v261, %v331
    %v335 = vxor.u32 %v334, 2147483648
    %v336 = vmul.f32 %v335, 1.442695
    %v337 = vpow.pop %v336
    %v338 = vadd.f32 %v337, 1.0
    %v339 = vrcp.pop %v338
    %v340 = vmul.f32 1.0, %v339
    %v341 = vtanh.pop %v334
    %v342 = vmul.f32 %v340, %v248
    %344 = vrot.lane.b32.xlu0 %v341, 64
    %v345 = vpop.permute.xlu0 %344
    %v347 = vmul.f32 %v340, %v345
    %349 = vrot.lane.b32.xlu0 %v347, 32
    %v350 = vpop.permute.xlu0 %349
    %v352 = vadd.f32 %v342, %v350
    %v353 = vtanh.pop %v352
    %355 = vrot.lane.b32.xlu0 %v353, 64
    %v356 = vpop.permute.xlu0 %355
    %v358 = vmul.f32 %v340, %v356
    %360 = vrot.lane.b32.xlu0 %v358, 32
    %v361 = vpop.permute.xlu0 %360
    %363 = vst.msk [vmem:[#allocation3 + $0x2] sm:$0x3] %vm259, %v361
    %v364 = vld [vmem:[#allocation2 + $0x4] sm:$0x3]
    %v365 = vsel %vm156, %v361, 0
    %367 = vmatprep.subr.mxu0 0.0
    %368 = vmatpush1.msra.mxu0 %v151
    %369 = vmatprep.subr.mxu0 0.0
    %370 = vmatpush1.msra.mxu0 %v152
    %371 = vmatprep.subr.mxu0 0.0
    %372 = vmatpush1.msra.mxu0 %v153
    %373 = vmatprep.subr.mxu0 0.0
    %374 = vmatpush1.msra.mxu0 %v154
    %375 = vmatprep.subr.mxu0 0.0
    %376 = vmatpush1.msra.mxu0 0.0
    %377 = vmatprep.subr.mxu0 0.0
    %378 = vmatpush1.msra.mxu0 0.0
    %379 = vmatprep.subr.mxu0 0.0
    %380 = vmatpush1.msra.mxu0 0.0
    %381 = vmatprep.subr.mxu0 0.0
    %382 = vmatpush1.msra.mxu0 0.0
    %383 = vmatprep.subr.mxu0 0.0
    %384 = vmatpush1.msra.mxu0 0.0
    %385 = vmatprep.subr.mxu0 0.0
    %386 = vmatpush1.msra.mxu0 0.0
    %387 = vmatprep.subr.mxu0 0.0
    %388 = vmatpush1.msra.mxu0 0.0
    %389 = vmatprep.subr.mxu0 0.0
    %390 = vmatpush1.msra.mxu0 0.0
    %391 = vmatprep.subr.mxu0 0.0
    %392 = vmatpush1.msra.mxu0 0.0
    %393 = vmatprep.subr.mxu0 0.0
    %394 = vmatpush1.msra.mxu0 0.0
    %395 = vmatprep.subr.mxu0 0.0
    %396 = vmatpush1.msra.mxu0 0.0
    %397 = vmatprep.subr.mxu0 0.0
    %398 = vmatpush1.msra.mxu0 0.0
    %399 = vmatprep.subr.mxu0 0.0
    %400 = vmatpush1.msra.mxu0 0.0
    %401 = vmatprep.subr.mxu0 0.0
    %402 = vmatpush1.msra.mxu0 0.0
    %403 = vmatprep.subr.mxu0 0.0
    %404 = vmatpush1.msra.mxu0 0.0
    %405 = vmatprep.subr.mxu0 0.0
    %406 = vmatpush1.msra.mxu0 0.0
    %407 = vmatprep.subr.mxu0 0.0
    %408 = vmatpush1.msra.mxu0 0.0
    %409 = vmatprep.subr.mxu0 0.0
    %410 = vmatpush1.msra.mxu0 0.0
    %411 = vmatprep.subr.mxu0 0.0
    %412 = vmatpush1.msra.mxu0 0.0
    %413 = vmatprep.subr.mxu0 0.0
    %414 = vmatpush1.msra.mxu0 0.0
    %415 = vmatprep.subr.mxu0 0.0
    %416 = vmatpush1.msra.mxu0 0.0
    %417 = vmatprep.subr.mxu0 0.0
    %418 = vmatpush1.msra.mxu0 0.0
    %419 = vmatprep.subr.mxu0 0.0
    %420 = vmatpush1.msra.mxu0 0.0
    %421 = vmatprep.subr.mxu0 0.0
    %422 = vmatpush1.msra.mxu0 0.0
    %423 = vmatprep.subr.mxu0 0.0
    %424 = vmatpush1.msra.mxu0 0.0
    %425 = vmatprep.subr.mxu0 0.0
    %426 = vmatpush1.msra.mxu0 0.0
    %427 = vmatprep.subr.mxu0 0.0
    %428 = vmatpush1.msra.mxu0 0.0
    %429 = vmatprep.subr.mxu0 0.0
    %430 = vmatpush1.msra.mxu0 0.0
    %431 = vmatprep.mubr.f32.mxu0 0.0
    %432 = vmatmul.mubr.f32.gmra.mrb[0].mxu0 %v365
    %v433 = vpop.f32.mrb[0].mxu0
    %v434 = vadd.f32 0.0, %v433
    %v435 = vpop.f32.mrb[0].mxu0
    %436 = vdwg.mxu0
    %v437 = vadd.f32 %v364, %v434
    %v438 = vxor.u32 %v437, 2147483648
    %v439 = vmul.f32 %v438, 1.442695
    %v440 = vpow.pop %v439
    %v441 = vadd.f32 %v440, 1.0
    %v442 = vrcp.pop %v441
    %v443 = vmul.f32 1.0, %v442
    %v444 = vtanh.pop %v437
    %v445 = vmul.f32 %v443, %v352
    %447 = vrot.lane.b32.xlu0 %v444, 64
    %v448 = vpop.permute.xlu0 %447
    %v450 = vmul.f32 %v443, %v448
    %452 = vrot.lane.b32.xlu0 %v450, 32
    %v453 = vpop.permute.xlu0 %452
    %v455 = vadd.f32 %v445, %v453
    %v456 = vtanh.pop %v455
    %458 = vrot.lane.b32.xlu0 %v456, 64
    %v459 = vpop.permute.xlu0 %458
    %v461 = vmul.f32 %v443, %v459
    %463 = vrot.lane.b32.xlu0 %v461, 32
    %v464 = vpop.permute.xlu0 %463
    %466 = vst.msk [vmem:[#allocation3 + $0x4] sm:$0x3] %vm259, %v464
    %v467 = vld [vmem:[#allocation2 + $0x6] sm:$0x3]
    %v468 = vsel %vm156, %v464, 0
    %470 = vmatprep.subr.mxu0 0.0
    %471 = vmatpush1.msra.mxu0 %v151
    %472 = vmatprep.subr.mxu0 0.0
    %473 = vmatpush1.msra.mxu0 %v152
    %474 = vmatprep.subr.mxu0 0.0
    %475 = vmatpush1.msra.mxu0 %v153
    %476 = vmatprep.subr.mxu0 0.0
    %477 = vmatpush1.msra.mxu0 %v154
    %478 = vmatprep.subr.mxu0 0.0
    %479 = vmatpush1.msra.mxu0 0.0
    %480 = vmatprep.subr.mxu0 0.0
    %481 = vmatpush1.msra.mxu0 0.0
    %482 = vmatprep.subr.mxu0 0.0
    %483 = vmatpush1.msra.mxu0 0.0
    %484 = vmatprep.subr.mxu0 0.0
    %485 = vmatpush1.msra.mxu0 0.0
    %486 = vmatprep.subr.mxu0 0.0
    %487 = vmatpush1.msra.mxu0 0.0
    %488 = vmatprep.subr.mxu0 0.0
    %489 = vmatpush1.msra.mxu0 0.0
    %490 = vmatprep.subr.mxu0 0.0
    %491 = vmatpush1.msra.mxu0 0.0
    %492 = vmatprep.subr.mxu0 0.0
    %493 = vmatpush1.msra.mxu0 0.0
    %494 = vmatprep.subr.mxu0 0.0
    %495 = vmatpush1.msra.mxu0 0.0
    %496 = vmatprep.subr.mxu0 0.0
    %497 = vmatpush1.msra.mxu0 0.0
    %498 = vmatprep.subr.mxu0 0.0
    %499 = vmatpush1.msra.mxu0 0.0
    %500 = vmatprep.subr.mxu0 0.0
    %501 = vmatpush1.msra.mxu0 0.0
    %502 = vmatprep.subr.mxu0 0.0
    %503 = vmatpush1.msra.mxu0 0.0
    %504 = vmatprep.subr.mxu0 0.0
    %505 = vmatpush1.msra.mxu0 0.0
    %506 = vmatprep.subr.mxu0 0.0
    %507 = vmatpush1.msra.mxu0 0.0
    %508 = vmatprep.subr.mxu0 0.0
    %509 = vmatpush1.msra.mxu0 0.0
    %510 = vmatprep.subr.mxu0 0.0
    %511 = vmatpush1.msra.mxu0 0.0
    %512 = vmatprep.subr.mxu0 0.0
    %513 = vmatpush1.msra.mxu0 0.0
    %514 = vmatprep.subr.mxu0 0.0
    %515 = vmatpush1.msra.mxu0 0.0
    %516 = vmatprep.subr.mxu0 0.0
    %517 = vmatpush1.msra.mxu0 0.0
    %518 = vmatprep.subr.mxu0 0.0
    %519 = vmatpush1.msra.mxu0 0.0
    %520 = vmatprep.subr.mxu0 0.0
    %521 = vmatpush1.msra.mxu0 0.0
    %522 = vmatprep.subr.mxu0 0.0
    %523 = vmatpush1.msra.mxu0 0.0
    %524 = vmatprep.subr.mxu0 0.0
    %525 = vmatpush1.msra.mxu0 0.0
    %526 = vmatprep.subr.mxu0 0.0
    %527 = vmatpush1.msra.mxu0 0.0
    %528 = vmatprep.subr.mxu0 0.0
    %529 = vmatpush1.msra.mxu0 0.0
    %530 = vmatprep.subr.mxu0 0.0
    %531 = vmatpush1.msra.mxu0 0.0
    %532 = vmatprep.subr.mxu0 0.0
    %533 = vmatpush1.msra.mxu0 0.0
    %534 = vmatprep.mubr.f32.mxu0 0.0
    %535 = vmatmul.mubr.f32.gmra.mrb[0].mxu0 %v468
    %v536 = vpop.f32.mrb[0].mxu0
    %v537 = vadd.f32 0.0, %v536
    %v538 = vpop.f32.mrb[0].mxu0
    %539 = vdwg.mxu0
    %v540 = vadd.f32 %v467, %v537
    %v541 = vxor.u32 %v540, 2147483648
    %v542 = vmul.f32 %v541, 1.442695
    %v543 = vpow.pop %v542
    %v544 = vadd.f32 %v543, 1.0
    %v545 = vrcp.pop %v544
    %v546 = vmul.f32 1.0, %v545
    %v547 = vtanh.pop %v540
    %v548 = vmul.f32 %v546, %v455
    %550 = vrot.lane.b32.xlu0 %v547, 64
    %v551 = vpop.permute.xlu0 %550
    %v553 = vmul.f32 %v546, %v551
    %555 = vrot.lane.b32.xlu0 %v553, 32
    %v556 = vpop.permute.xlu0 %555
    %v558 = vadd.f32 %v548, %v556
    %v559 = vtanh.pop %v558
    %561 = vrot.lane.b32.xlu0 %v559, 64
    %v562 = vpop.permute.xlu0 %561
    %v564 = vmul.f32 %v546, %v562
    %566 = vrot.lane.b32.xlu0 %v564, 32
    %v567 = vpop.permute.xlu0 %566
    %569 = vst.msk [vmem:[#allocation3 + $0x6] sm:$0x3] %vm259, %v567
    %v570 = vld [vmem:[#allocation2 + $0x8] sm:$0x3]
    %v571 = vsel %vm156, %v567, 0
    %573 = vmatprep.subr.mxu0 0.0
    %574 = vmatpush1.msra.mxu0 %v151
    %575 = vmatprep.subr.mxu0 0.0
    %576 = vmatpush1.msra.mxu0 %v152
    %577 = vmatprep.subr.mxu0 0.0
    %578 = vmatpush1.msra.mxu0 %v153
    %579 = vmatprep.subr.mxu0 0.0
    %580 = vmatpush1.msra.mxu0 %v154
    %581 = vmatprep.subr.mxu0 0.0
    %582 = vmatpush1.msra.mxu0 0.0
    %583 = vmatprep.subr.mxu0 0.0
    %584 = vmatpush1.msra.mxu0 0.0
    %585 = vmatprep.subr.mxu0 0.0
    %586 = vmatpush1.msra.mxu0 0.0
    %587 = vmatprep.subr.mxu0 0.0
    %588 = vmatpush1.msra.mxu0 0.0
    %589 = vmatprep.subr.mxu0 0.0
    %590 = vmatpush1.msra.mxu0 0.0
    %591 = vmatprep.subr.mxu0 0.0
    %592 = vmatpush1.msra.mxu0 0.0
    %593 = vmatprep.subr.mxu0 0.0
    %594 = vmatpush1.msra.mxu0 0.0
    %595 = vmatprep.subr.mxu0 0.0
    %596 = vmatpush1.msra.mxu0 0.0
    %597 = vmatprep.subr.mxu0 0.0
    %598 = vmatpush1.msra.mxu0 0.0
    %599 = vmatprep.subr.mxu0 0.0
    %600 = vmatpush1.msra.mxu0 0.0
    %601 = vmatprep.subr.mxu0 0.0
    %602 = vmatpush1.msra.mxu0 0.0
    %603 = vmatprep.subr.mxu0 0.0
    %604 = vmatpush1.msra.mxu0 0.0
    %605 = vmatprep.subr.mxu0 0.0
    %606 = vmatpush1.msra.mxu0 0.0
    %607 = vmatprep.subr.mxu0 0.0
    %608 = vmatpush1.msra.mxu0 0.0
    %609 = vmatprep.subr.mxu0 0.0
    %610 = vmatpush1.msra.mxu0 0.0
    %611 = vmatprep.subr.mxu0 0.0
    %612 = vmatpush1.msra.mxu0 0.0
    %613 = vmatprep.subr.mxu0 0.0
    %614 = vmatpush1.msra.mxu0 0.0
    %615 = vmatprep.subr.mxu0 0.0
    %616 = vmatpush1.msra.mxu0 0.0
    %617 = vmatprep.subr.mxu0 0.0
    %618 = vmatpush1.msra.mxu0 0.0
    %619 = vmatprep.subr.mxu0 0.0
    %620 = vmatpush1.msra.mxu0 0.0
    %621 = vmatprep.subr.mxu0 0.0
    %622 = vmatpush1.msra.mxu0 0.0
    %623 = vmatprep.subr.mxu0 0.0
    %624 = vmatpush1.msra.mxu0 0.0
    %625 = vmatprep.subr.mxu0 0.0
    %626 = vmatpush1.msra.mxu0 0.0
    %627 = vmatprep.subr.mxu0 0.0
    %628 = vmatpush1.msra.mxu0 0.0
    %629 = vmatprep.subr.mxu0 0.0
    %630 = vmatpush1.msra.mxu0 0.0
    %631 = vmatprep.subr.mxu0 0.0
    %632 = vmatpush1.msra.mxu0 0.0
    %633 = vmatprep.subr.mxu0 0.0
    %634 = vmatpush1.msra.mxu0 0.0
    %635 = vmatprep.subr.mxu0 0.0
    %636 = vmatpush1.msra.mxu0 0.0
    %637 = vmatprep.mubr.f32.mxu0 0.0
    %638 = vmatmul.mubr.f32.gmra.mrb[0].mxu0 %v571
    %v639 = vpop.f32.mrb[0].mxu0
    %v640 = vadd.f32 0.0, %v639
    %v641 = vpop.f32.mrb[0].mxu0
    %642 = vdwg.mxu0
    %v643 = vadd.f32 %v570, %v640
    %v644 = vxor.u32 %v643, 2147483648
    %v645 = vmul.f32 %v644, 1.442695
    %v646 = vpow.pop %v645
    %v647 = vadd.f32 %v646, 1.0
    %v648 = vrcp.pop %v647
    %v649 = vmul.f32 1.0, %v648
    %v650 = vtanh.pop %v643
    %v651 = vmul.f32 %v649, %v558
    %653 = vrot.lane.b32.xlu0 %v650, 64
    %v654 = vpop.permute.xlu0 %653
    %v656 = vmul.f32 %v649, %v654
    %658 = vrot.lane.b32.xlu0 %v656, 32
    %v659 = vpop.permute.xlu0 %658
    %v661 = vadd.f32 %v651, %v659
    %v662 = vtanh.pop %v661
    %664 = vrot.lane.b32.xlu0 %v662, 64
    %v665 = vpop.permute.xlu0 %664
    %v667 = vmul.f32 %v649, %v665
    %669 = vrot.lane.b32.xlu0 %v667, 32
    %v670 = vpop.permute.xlu0 %669
    %672 = vst.msk [vmem:[#allocation3 + $0x8] sm:$0x3] %vm259, %v670
    %v673 = vld [vmem:[#allocation2 + $0xa] sm:$0x3]
    %v674 = vsel %vm156, %v670, 0
    %676 = vmatprep.subr.mxu0 0.0
    %677 = vmatpush1.msra.mxu0 %v151
    %678 = vmatprep.subr.mxu0 0.0
    %679 = vmatpush1.msra.mxu0 %v152
    %680 = vmatprep.subr.mxu0 0.0
    %681 = vmatpush1.msra.mxu0 %v153
    %682 = vmatprep.subr.mxu0 0.0
    %683 = vmatpush1.msra.mxu0 %v154
    %684 = vmatprep.subr.mxu0 0.0
    %685 = vmatpush1.msra.mxu0 0.0
    %686 = vmatprep.subr.mxu0 0.0
    %687 = vmatpush1.msra.mxu0 0.0
    %688 = vmatprep.subr.mxu0 0.0
    %689 = vmatpush1.msra.mxu0 0.0
    %690 = vmatprep.subr.mxu0 0.0
    %691 = vmatpush1.msra.mxu0 0.0
    %692 = vmatprep.subr.mxu0 0.0
    %693 = vmatpush1.msra.mxu0 0.0
    %694 = vmatprep.subr.mxu0 0.0
    %695 = vmatpush1.msra.mxu0 0.0
    %696 = vmatprep.subr.mxu0 0.0
    %697 = vmatpush1.msra.mxu0 0.0
    %698 = vmatprep.subr.mxu0 0.0
    %699 = vmatpush1.msra.mxu0 0.0
    %700 = vmatprep.subr.mxu0 0.0
    %701 = vmatpush1.msra.mxu0 0.0
    %702 = vmatprep.subr.mxu0 0.0
    %703 = vmatpush1.msra.mxu0 0.0
    %704 = vmatprep.subr.mxu0 0.0
    %705 = vmatpush1.msra.mxu0 0.0
    %706 = vmatprep.subr.mxu0 0.0
    %707 = vmatpush1.msra.mxu0 0.0
    %708 = vmatprep.subr.mxu0 0.0
    %709 = vmatpush1.msra.mxu0 0.0
    %710 = vmatprep.subr.mxu0 0.0
    %711 = vmatpush1.msra.mxu0 0.0
    %712 = vmatprep.subr.mxu0 0.0
    %713 = vmatpush1.msra.mxu0 0.0
    %714 = vmatprep.subr.mxu0 0.0
    %715 = vmatpush1.msra.mxu0 0.0
    %716 = vmatprep.subr.mxu0 0.0
    %717 = vmatpush1.msra.mxu0 0.0
    %718 = vmatprep.subr.mxu0 0.0
    %719 = vmatpush1.msra.mxu0 0.0
    %720 = vmatprep.subr.mxu0 0.0
    %721 = vmatpush1.msra.mxu0 0.0
    %722 = vmatprep.subr.mxu0 0.0
    %723 = vmatpush1.msra.mxu0 0.0
    %724 = vmatprep.subr.mxu0 0.0
    %725 = vmatpush1.msra.mxu0 0.0
    %726 = vmatprep.subr.mxu0 0.0
    %727 = vmatpush1.msra.mxu0 0.0
    %728 = vmatprep.subr.mxu0 0.0
    %729 = vmatpush1.msra.mxu0 0.0
    %730 = vmatprep.subr.mxu0 0.0
    %731 = vmatpush1.msra.mxu0 0.0
    %732 = vmatprep.subr.mxu0 0.0
    %733 = vmatpush1.msra.mxu0 0.0
    %734 = vmatprep.subr.mxu0 0.0
    %735 = vmatpush1.msra.mxu0 0.0
    %736 = vmatprep.subr.mxu0 0.0
    %737 = vmatpush1.msra.mxu0 0.0
    %738 = vmatprep.subr.mxu0 0.0
    %739 = vmatpush1.msra.mxu0 0.0
    %740 = vmatprep.mubr.f32.mxu0 0.0
    %741 = vmatmul.mubr.f32.gmra.mrb[0].mxu0 %v674
    %v742 = vpop.f32.mrb[0].mxu0
    %v743 = vadd.f32 0.0, %v742
    %v744 = vpop.f32.mrb[0].mxu0
    %745 = vdwg.mxu0
    %v746 = vadd.f32 %v673, %v743
    %v747 = vxor.u32 %v746, 2147483648
    %v748 = vmul.f32 %v747, 1.442695
    %v749 = vpow.pop %v748
    %v750 = vadd.f32 %v749, 1.0
    %v751 = vrcp.pop %v750
    %v752 = vmul.f32 1.0, %v751
    %v753 = vtanh.pop %v746
    %v754 = vmul.f32 %v752, %v661
    %756 = vrot.lane.b32.xlu0 %v753, 64
    %v757 = vpop.permute.xlu0 %756
    %v759 = vmul.f32 %v752, %v757
    %761 = vrot.lane.b32.xlu0 %v759, 32
    %v762 = vpop.permute.xlu0 %761
    %v764 = vadd.f32 %v754, %v762
    %v765 = vtanh.pop %v764
    %767 = vrot.lane.b32.xlu0 %v765, 64
    %v768 = vpop.permute.xlu0 %767
    %v770 = vmul.f32 %v752, %v768
    %772 = vrot.lane.b32.xlu0 %v770, 32
    %v773 = vpop.permute.xlu0 %772
    %775 = vst.msk [vmem:[#allocation3 + $0xa] sm:$0x3] %vm259, %v773
    %v776 = vld [vmem:[#allocation2 + $0xc] sm:$0x3]
    %v777 = vsel %vm156, %v773, 0
    %779 = vmatprep.subr.mxu0 0.0
    %780 = vmatpush1.msra.mxu0 %v151
    %781 = vmatprep.subr.mxu0 0.0
    %782 = vmatpush1.msra.mxu0 %v152
    %783 = vmatprep.subr.mxu0 0.0
    %784 = vmatpush1.msra.mxu0 %v153
    %785 = vmatprep.subr.mxu0 0.0
    %786 = vmatpush1.msra.mxu0 %v154
    %787 = vmatprep.subr.mxu0 0.0
    %788 = vmatpush1.msra.mxu0 0.0
    %789 = vmatprep.subr.mxu0 0.0
    %790 = vmatpush1.msra.mxu0 0.0
    %791 = vmatprep.subr.mxu0 0.0
    %792 = vmatpush1.msra.mxu0 0.0
    %793 = vmatprep.subr.mxu0 0.0
    %794 = vmatpush1.msra.mxu0 0.0
    %795 = vmatprep.subr.mxu0 0.0
    %796 = vmatpush1.msra.mxu0 0.0
    %797 = vmatprep.subr.mxu0 0.0
    %798 = vmatpush1.msra.mxu0 0.0
    %799 = vmatprep.subr.mxu0 0.0
    %800 = vmatpush1.msra.mxu0 0.0
    %801 = vmatprep.subr.mxu0 0.0
    %802 = vmatpush1.msra.mxu0 0.0
    %803 = vmatprep.subr.mxu0 0.0
    %804 = vmatpush1.msra.mxu0 0.0
    %805 = vmatprep.subr.mxu0 0.0
    %806 = vmatpush1.msra.mxu0 0.0
    %807 = vmatprep.subr.mxu0 0.0
    %808 = vmatpush1.msra.mxu0 0.0
    %809 = vmatprep.subr.mxu0 0.0
    %810 = vmatpush1.msra.mxu0 0.0
    %811 = vmatprep.subr.mxu0 0.0
    %812 = vmatpush1.msra.mxu0 0.0
    %813 = vmatprep.subr.mxu0 0.0
    %814 = vmatpush1.msra.mxu0 0.0
    %815 = vmatprep.subr.mxu0 0.0
    %816 = vmatpush1.msra.mxu0 0.0
    %817 = vmatprep.subr.mxu0 0.0
    %818 = vmatpush1.msra.mxu0 0.0
    %819 = vmatprep.subr.mxu0 0.0
    %820 = vmatpush1.msra.mxu0 0.0
    %821 = vmatprep.subr.mxu0 0.0
    %822 = vmatpush1.msra.mxu0 0.0
    %823 = vmatprep.subr.mxu0 0.0
    %824 = vmatpush1.msra.mxu0 0.0
    %825 = vmatprep.subr.mxu0 0.0
    %826 = vmatpush1.msra.mxu0 0.0
    %827 = vmatprep.subr.mxu0 0.0
    %828 = vmatpush1.msra.mxu0 0.0
    %829 = vmatprep.subr.mxu0 0.0
    %830 = vmatpush1.msra.mxu0 0.0
    %831 = vmatprep.subr.mxu0 0.0
    %832 = vmatpush1.msra.mxu0 0.0
    %833 = vmatprep.subr.mxu0 0.0
    %834 = vmatpush1.msra.mxu0 0.0
    %835 = vmatprep.subr.mxu0 0.0
    %836 = vmatpush1.msra.mxu0 0.0
    %837 = vmatprep.subr.mxu0 0.0
    %838 = vmatpush1.msra.mxu0 0.0
    %839 = vmatprep.subr.mxu0 0.0
    %840 = vmatpush1.msra.mxu0 0.0
    %841 = vmatprep.subr.mxu0 0.0
    %842 = vmatpush1.msra.mxu0 0.0
    %843 = vmatprep.mubr.f32.mxu0 0.0
    %844 = vmatmul.mubr.f32.gmra.mrb[0].mxu0 %v777
    %v845 = vpop.f32.mrb[0].mxu0
    %v846 = vadd.f32 0.0, %v845
    %v847 = vpop.f32.mrb[0].mxu0
    %848 = vdwg.mxu0
    %v849 = vadd.f32 %v776, %v846
    %v850 = vxor.u32 %v849, 2147483648
    %v851 = vmul.f32 %v850, 1.442695
    %v852 = vpow.pop %v851
    %v853 = vadd.f32 %v852, 1.0
    %v854 = vrcp.pop %v853
    %v855 = vmul.f32 1.0, %v854
    %v856 = vtanh.pop %v849
    %v857 = vmul.f32 %v855, %v764
    %859 = vrot.lane.b32.xlu0 %v856, 64
    %v860 = vpop.permute.xlu0 %859
    %v862 = vmul.f32 %v855, %v860
    %864 = vrot.lane.b32.xlu0 %v862, 32
    %v865 = vpop.permute.xlu0 %864
    %v867 = vadd.f32 %v857, %v865
    %v868 = vtanh.pop %v867
    %870 = vrot.lane.b32.xlu0 %v868, 64
    %v871 = vpop.permute.xlu0 %870
    %v873 = vmul.f32 %v855, %v871
    %875 = vrot.lane.b32.xlu0 %v873, 32
    %v876 = vpop.permute.xlu0 %875
    %878 = vst.msk [vmem:[#allocation3 + $0xc] sm:$0x3] %vm259, %v876
    %v879 = vld [vmem:[#allocation2 + $0xe] sm:$0x3]
    %v880 = vsel %vm156, %v876, 0
    %882 = vmatprep.subr.mxu0 0.0
    %883 = vmatpush1.msra.mxu0 %v151
    %884 = vmatprep.subr.mxu0 0.0
    %885 = vmatpush1.msra.mxu0 %v152
    %886 = vmatprep.subr.mxu0 0.0
    %887 = vmatpush1.msra.mxu0 %v153
    %888 = vmatprep.subr.mxu0 0.0
    %889 = vmatpush1.msra.mxu0 %v154
    %890 = vmatprep.subr.mxu0 0.0
    %891 = vmatpush1.msra.mxu0 0.0
    %892 = vmatprep.subr.mxu0 0.0
    %893 = vmatpush1.msra.mxu0 0.0
    %894 = vmatprep.subr.mxu0 0.0
    %895 = vmatpush1.msra.mxu0 0.0
    %896 = vmatprep.subr.mxu0 0.0
    %897 = vmatpush1.msra.mxu0 0.0
    %898 = vmatprep.subr.mxu0 0.0
    %899 = vmatpush1.msra.mxu0 0.0
    %900 = vmatprep.subr.mxu0 0.0
    %901 = vmatpush1.msra.mxu0 0.0
    %902 = vmatprep.subr.mxu0 0.0
    %903 = vmatpush1.msra.mxu0 0.0
    %904 = vmatprep.subr.mxu0 0.0
    %905 = vmatpush1.msra.mxu0 0.0
    %906 = vmatprep.subr.mxu0 0.0
    %907 = vmatpush1.msra.mxu0 0.0
    %908 = vmatprep.subr.mxu0 0.0
    %909 = vmatpush1.msra.mxu0 0.0
    %910 = vmatprep.subr.mxu0 0.0
    %911 = vmatpush1.msra.mxu0 0.0
    %912 = vmatprep.subr.mxu0 0.0
    %913 = vmatpush1.msra.mxu0 0.0
    %914 = vmatprep.subr.mxu0 0.0
    %915 = vmatpush1.msra.mxu0 0.0
    %916 = vmatprep.subr.mxu0 0.0
    %917 = vmatpush1.msra.mxu0 0.0
    %918 = vmatprep.subr.mxu0 0.0
    %919 = vmatpush1.msra.mxu0 0.0
    %920 = vmatprep.subr.mxu0 0.0
    %921 = vmatpush1.msra.mxu0 0.0
    %922 = vmatprep.subr.mxu0 0.0
    %923 = vmatpush1.msra.mxu0 0.0
    %924 = vmatprep.subr.mxu0 0.0
    %925 = vmatpush1.msra.mxu0 0.0
    %926 = vmatprep.subr.mxu0 0.0
    %927 = vmatpush1.msra.mxu0 0.0
    %928 = vmatprep.subr.mxu0 0.0
    %929 = vmatpush1.msra.mxu0 0.0
    %930 = vmatprep.subr.mxu0 0.0
    %931 = vmatpush1.msra.mxu0 0.0
    %932 = vmatprep.subr.mxu0 0.0
    %933 = vmatpush1.msra.mxu0 0.0
    %934 = vmatprep.subr.mxu0 0.0
    %935 = vmatpush1.msra.mxu0 0.0
    %936 = vmatprep.subr.mxu0 0.0
    %937 = vmatpush1.msra.mxu0 0.0
    %938 = vmatprep.subr.mxu0 0.0
    %939 = vmatpush1.msra.mxu0 0.0
    %940 = vmatprep.subr.mxu0 0.0
    %941 = vmatpush1.msra.mxu0 0.0
    %942 = vmatprep.subr.mxu0 0.0
    %943 = vmatpush1.msra.mxu0 0.0
    %944 = vmatprep.subr.mxu0 0.0
    %945 = vmatpush1.msra.mxu0 0.0
    %946 = vmatprep.mubr.f32.mxu0 0.0
    %947 = vmatmul.mubr.f32.gmra.mrb[0].mxu0 %v880
    %v948 = vpop.f32.mrb[0].mxu0
    %v949 = vadd.f32 0.0, %v948
    %v950 = vpop.f32.mrb[0].mxu0
    %951 = vdwg.mxu0
    %v952 = vadd.f32 %v879, %v949
    %v953 = vxor.u32 %v952, 2147483648
    %v954 = vmul.f32 %v953, 1.442695
    %v955 = vpow.pop %v954
    %v956 = vadd.f32 %v955, 1.0
    %v957 = vrcp.pop %v956
    %v958 = vmul.f32 1.0, %v957
    %v959 = vtanh.pop %v952
    %v960 = vmul.f32 %v958, %v867
    %962 = vrot.lane.b32.xlu0 %v959, 64
    %v963 = vpop.permute.xlu0 %962
    %v965 = vmul.f32 %v958, %v963
    %967 = vrot.lane.b32.xlu0 %v965, 32
    %v968 = vpop.permute.xlu0 %967
    %v970 = vadd.f32 %v960, %v968
    %v971 = vtanh.pop %v970
    %973 = vrot.lane.b32.xlu0 %v971, 64
    %v974 = vpop.permute.xlu0 %973
    %v976 = vmul.f32 %v958, %v974
    %978 = vrot.lane.b32.xlu0 %v976, 32
    %v979 = vpop.permute.xlu0 %978
    %981 = vst.msk [vmem:[#allocation3 + $0xe] sm:$0x3] %vm259, %v979
    %v982 = vld [vmem:[#allocation3] sm:$0xff]
    %v983 = vld [vmem:[#allocation3 + $0x8] sm:$0xff]
    %v984 = vld [vmem:[%s4] sm:$0xff]
    %v985 = vld [vmem:[%s4 + $0x8] sm:$0xff]
    %v986 = vld [vmem:[%s4 + $0x10] sm:$0xff]
    %v987 = vld [vmem:[%s4 + $0x18] sm:$0xff]
    %v988 = vld [vmem:[%s6] sm:$0x1]
    %v990 = vlaneseq
    %v991 = vshrl.u32 %v990, 7
    %v992 = vsub.s32 0, %v991
    %v993 = vrot.slane %v988, %v992
    %v996 = vsel %vm156, %v982, 0
    %v999 = vsel %vm156, %v983, 0
    %1001 = vmatprep.subr.mxu0 0.0
    %1002 = vmatpush1.msra.mxu0 %v984
    %1003 = vmatprep.subr.mxu0 0.0
    %1004 = vmatpush1.msra.mxu0 %v985
    %1005 = vmatprep.subr.mxu0 0.0
    %1006 = vmatpush1.msra.mxu0 %v986
    %1007 = vmatprep.subr.mxu0 0.0
    %1008 = vmatpush1.msra.mxu0 %v987
    %1009 = vmatprep.subr.mxu0 0.0
    %1010 = vmatpush1.msra.mxu0 0.0
    %1011 = vmatprep.subr.mxu0 0.0
    %1012 = vmatpush1.msra.mxu0 0.0
    %1013 = vmatprep.subr.mxu0 0.0
    %1014 = vmatpush1.msra.mxu0 0.0
    %1015 = vmatprep.subr.mxu0 0.0
    %1016 = vmatpush1.msra.mxu0 0.0
    %1017 = vmatprep.subr.mxu0 0.0
    %1018 = vmatpush1.msra.mxu0 0.0
    %1019 = vmatprep.subr.mxu0 0.0
    %1020 = vmatpush1.msra.mxu0 0.0
    %1021 = vmatprep.subr.mxu0 0.0
    %1022 = vmatpush1.msra.mxu0 0.0
    %1023 = vmatprep.subr.mxu0 0.0
    %1024 = vmatpush1.msra.mxu0 0.0
    %1025 = vmatprep.subr.mxu0 0.0
    %1026 = vmatpush1.msra.mxu0 0.0
    %1027 = vmatprep.subr.mxu0 0.0
    %1028 = vmatpush1.msra.mxu0 0.0
    %1029 = vmatprep.subr.mxu0 0.0
    %1030 = vmatpush1.msra.mxu0 0.0
    %1031 = vmatprep.subr.mxu0 0.0
    %1032 = vmatpush1.msra.mxu0 0.0
    %1033 = vmatprep.subr.mxu0 0.0
    %1034 = vmatpush1.msra.mxu0 0.0
    %1035 = vmatprep.subr.mxu0 0.0
    %1036 = vmatpush1.msra.mxu0 0.0
    %1037 = vmatprep.subr.mxu0 0.0
    %1038 = vmatpush1.msra.mxu0 0.0
    %1039 = vmatprep.subr.mxu0 0.0
    %1040 = vmatpush1.msra.mxu0 0.0
    %1041 = vmatprep.subr.mxu0 0.0
    %1042 = vmatpush1.msra.mxu0 0.0
    %1043 = vmatprep.subr.mxu0 0.0
    %1044 = vmatpush1.msra.mxu0 0.0
    %1045 = vmatprep.subr.mxu0 0.0
    %1046 = vmatpush1.msra.mxu0 0.0
    %1047 = vmatprep.subr.mxu0 0.0
    %1048 = vmatpush1.msra.mxu0 0.0
    %1049 = vmatprep.subr.mxu0 0.0
    %1050 = vmatpush1.msra.mxu0 0.0
    %1051 = vmatprep.subr.mxu0 0.0
    %1052 = vmatpush1.msra.mxu0 0.0
    %1053 = vmatprep.subr.mxu0 0.0
    %1054 = vmatpush1.msra.mxu0 0.0
    %1055 = vmatprep.subr.mxu0 0.0
    %1056 = vmatpush1.msra.mxu0 0.0
    %1057 = vmatprep.subr.mxu0 0.0
    %1058 = vmatpush1.msra.mxu0 0.0
    %1059 = vmatprep.subr.mxu0 0.0
    %1060 = vmatpush1.msra.mxu0 0.0
    %1061 = vmatprep.subr.mxu0 0.0
    %1062 = vmatpush1.msra.mxu0 0.0
    %1063 = vmatprep.subr.mxu0 0.0
    %1064 = vmatpush1.msra.mxu0 0.0
    %1065 = vmatprep.mubr.f32.mxu0 0.0
    %1066 = vmatmul.mubr.f32.gmra.mrb[0].mxu0 %v996
    %v1067 = vpop.f32.mrb[0].mxu0
    %v1068 = vadd.f32 %v993, %v1067
    %v1069 = vpop.f32.mrb[0].mxu0
    %1070 = vmatprep.mubr.f32.mxu0 0.0
    %1071 = vmatmul.mubr.f32.gmra.mrb[0].mxu0 %v999
    %v1072 = vpop.f32.mrb[0].mxu0
    %v1073 = vadd.f32 %v993, %v1072
    %v1074 = vpop.f32.mrb[0].mxu0
    %1075 = vdwg.mxu0
    %1076 = vst [vmem:[#allocation2] sm:$0xff] %v1068
    %1077 = vst [vmem:[#allocation2 + $0x8] sm:$0xff] %v1073
    %v1078 = vld [vmem:[%s5] sm:$0xff]
    %v1079 = vld [vmem:[%s5 + $0x8] sm:$0xff]
    %v1080 = vld [vmem:[%s5 + $0x10] sm:$0xff]
    %v1081 = vld [vmem:[%s5 + $0x18] sm:$0xff]
    %v1082 = vld [vmem:[#allocation2] sm:$0x3]
    %1083 = vmatprep.subr.mxu0 0.0
    %1084 = vmatpush1.msra.mxu0 %v1078
    %1085 = vmatprep.subr.mxu0 0.0
    %1086 = vmatpush1.msra.mxu0 %v1079
    %1087 = vmatprep.subr.mxu0 0.0
    %1088 = vmatpush1.msra.mxu0 %v1080
    %1089 = vmatprep.subr.mxu0 0.0
    %1090 = vmatpush1.msra.mxu0 %v1081
    %1091 = vmatprep.subr.mxu0 0.0
    %1092 = vmatpush1.msra.mxu0 0.0
    %1093 = vmatprep.subr.mxu0 0.0
    %1094 = vmatpush1.msra.mxu0 0.0
    %1095 = vmatprep.subr.mxu0 0.0
    %1096 = vmatpush1.msra.mxu0 0.0
    %1097 = vmatprep.subr.mxu0 0.0
    %1098 = vmatpush1.msra.mxu0 0.0
    %1099 = vmatprep.subr.mxu0 0.0
    %1100 = vmatpush1.msra.mxu0 0.0
    %1101 = vmatprep.subr.mxu0 0.0
    %1102 = vmatpush1.msra.mxu0 0.0
    %1103 = vmatprep.subr.mxu0 0.0
    %1104 = vmatpush1.msra.mxu0 0.0
    %1105 = vmatprep.subr.mxu0 0.0
    %1106 = vmatpush1.msra.mxu0 0.0
    %1107 = vmatprep.subr.mxu0 0.0
    %1108 = vmatpush1.msra.mxu0 0.0
    %1109 = vmatprep.subr.mxu0 0.0
    %1110 = vmatpush1.msra.mxu0 0.0
    %1111 = vmatprep.subr.mxu0 0.0
    %1112 = vmatpush1.msra.mxu0 0.0
    %1113 = vmatprep.subr.mxu0 0.0
    %1114 = vmatpush1.msra.mxu0 0.0
    %1115 = vmatprep.subr.mxu0 0.0
    %1116 = vmatpush1.msra.mxu0 0.0
    %1117 = vmatprep.subr.mxu0 0.0
    %1118 = vmatpush1.msra.mxu0 0.0
    %1119 = vmatprep.subr.mxu0 0.0
    %1120 = vmatpush1.msra.mxu0 0.0
    %1121 = vmatprep.subr.mxu0 0.0
    %1122 = vmatpush1.msra.mxu0 0.0
    %1123 = vmatprep.subr.mxu0 0.0
    %1124 = vmatpush1.msra.mxu0 0.0
    %1125 = vmatprep.subr.mxu0 0.0
    %1126 = vmatpush1.msra.mxu0 0.0
    %1127 = vmatprep.subr.mxu0 0.0
    %1128 = vmatpush1.msra.mxu0 0.0
    %1129 = vmatprep.subr.mxu0 0.0
    %1130 = vmatpush1.msra.mxu0 0.0
    %1131 = vmatprep.subr.mxu0 0.0
    %1132 = vmatpush1.msra.mxu0 0.0
    %1133 = vmatprep.subr.mxu0 0.0
    %1134 = vmatpush1.msra.mxu0 0.0
    %1135 = vmatprep.subr.mxu0 0.0
    %1136 = vmatpush1.msra.mxu0 0.0
    %1137 = vmatprep.subr.mxu0 0.0
    %1138 = vmatpush1.msra.mxu0 0.0
    %1139 = vmatprep.subr.mxu0 0.0
    %1140 = vmatpush1.msra.mxu0 0.0
    %1141 = vmatprep.subr.mxu0 0.0
    %1142 = vmatpush1.msra.mxu0 0.0
    %1143 = vmatprep.subr.mxu0 0.0
    %1144 = vmatpush1.msra.mxu0 0.0
    %1145 = vmatprep.subr.mxu0 0.0
    %1146 = vmatpush1.msra.mxu0 0.0
    %1147 = vmatprep.mubr.f32.mxu0 0.0
    %1148 = vmatmul.mubr.f32.gmra.mrb[0].mxu0 %v158
    %v1149 = vpop.f32.mrb[0].mxu0
    %v1150 = vadd.f32 0.0, %v1149
    %v1151 = vpop.f32.mrb[0].mxu0
    %1152 = vdwg.mxu0
    %v1153 = vadd.f32 %v1082, %v1150
    %v1154 = vxor.u32 %v1153, 2147483648
    %v1155 = vmul.f32 %v1154, 1.442695
    %v1156 = vpow.pop %v1155
    %v1157 = vadd.f32 %v1156, 1.0
    %v1158 = vrcp.pop %v1157
    %v1159 = vmul.f32 1.0, %v1158
    %v1160 = vtanh.pop %v1153
    %v1161 = vmul.f32 %v1159, 0.0
    %1163 = vrot.lane.b32.xlu0 %v1160, 64
    %v1164 = vpop.permute.xlu0 %1163
    %v1166 = vmul.f32 %v1159, %v1164
    %1168 = vrot.lane.b32.xlu0 %v1166, 32
    %v1169 = vpop.permute.xlu0 %1168
    %v1171 = vadd.f32 %v1161, %v1169
    %v1172 = vtanh.pop %v1171
    %1174 = vrot.lane.b32.xlu0 %v1172, 64
    %v1175 = vpop.permute.xlu0 %1174
    %v1177 = vmul.f32 %v1159, %v1175
    %v1178 = vld [vmem:[#allocation2 + $0x2] sm:$0x3]
    %1180 = vrot.lane.b32.xlu0 %v1177, 32
    %v1181 = vpop.permute.xlu0 %1180
    %v1182 = vsel %vm156, %v1181, 0
    %1184 = vmatprep.subr.mxu0 0.0
    %1185 = vmatpush1.msra.mxu0 %v1078
    %1186 = vmatprep.subr.mxu0 0.0
    %1187 = vmatpush1.msra.mxu0 %v1079
    %1188 = vmatprep.subr.mxu0 0.0
    %1189 = vmatpush1.msra.mxu0 %v1080
    %1190 = vmatprep.subr.mxu0 0.0
    %1191 = vmatpush1.msra.mxu0 %v1081
    %1192 = vmatprep.subr.mxu0 0.0
    %1193 = vmatpush1.msra.mxu0 0.0
    %1194 = vmatprep.subr.mxu0 0.0
    %1195 = vmatpush1.msra.mxu0 0.0
    %1196 = vmatprep.subr.mxu0 0.0
    %1197 = vmatpush1.msra.mxu0 0.0
    %1198 = vmatprep.subr.mxu0 0.0
    %1199 = vmatpush1.msra.mxu0 0.0
    %1200 = vmatprep.subr.mxu0 0.0
    %1201 = vmatpush1.msra.mxu0 0.0
    %1202 = vmatprep.subr.mxu0 0.0
    %1203 = vmatpush1.msra.mxu0 0.0
    %1204 = vmatprep.subr.mxu0 0.0
    %1205 = vmatpush1.msra.mxu0 0.0
    %1206 = vmatprep.subr.mxu0 0.0
    %1207 = vmatpush1.msra.mxu0 0.0
    %1208 = vmatprep.subr.mxu0 0.0
    %1209 = vmatpush1.msra.mxu0 0.0
    %1210 = vmatprep.subr.mxu0 0.0
    %1211 = vmatpush1.msra.mxu0 0.0
    %1212 = vmatprep.subr.mxu0 0.0
    %1213 = vmatpush1.msra.mxu0 0.0
    %1214 = vmatprep.subr.mxu0 0.0
    %1215 = vmatpush1.msra.mxu0 0.0
    %1216 = vmatprep.subr.mxu0 0.0
    %1217 = vmatpush1.msra.mxu0 0.0
    %1218 = vmatprep.subr.mxu0 0.0
    %1219 = vmatpush1.msra.mxu0 0.0
    %1220 = vmatprep.subr.mxu0 0.0
    %1221 = vmatpush1.msra.mxu0 0.0
    %1222 = vmatprep.subr.mxu0 0.0
    %1223 = vmatpush1.msra.mxu0 0.0
    %1224 = vmatprep.subr.mxu0 0.0
    %1225 = vmatpush1.msra.mxu0 0.0
    %1226 = vmatprep.subr.mxu0 0.0
    %1227 = vmatpush1.msra.mxu0 0.0
    %1228 = vmatprep.subr.mxu0 0.0
    %1229 = vmatpush1.msra.mxu0 0.0
    %1230 = vmatprep.subr.mxu0 0.0
    %1231 = vmatpush1.msra.mxu0 0.0
    %1232 = vmatprep.subr.mxu0 0.0
    %1233 = vmatpush1.msra.mxu0 0.0
    %1234 = vmatprep.subr.mxu0 0.0
    %1235 = vmatpush1.msra.mxu0 0.0
    %1236 = vmatprep.subr.mxu0 0.0
    %1237 = vmatpush1.msra.mxu0 0.0
    %1238 = vmatprep.subr.mxu0 0.0
    %1239 = vmatpush1.msra.mxu0 0.0
    %1240 = vmatprep.subr.mxu0 0.0
    %1241 = vmatpush1.msra.mxu0 0.0
    %1242 = vmatprep.subr.mxu0 0.0
    %1243 = vmatpush1.msra.mxu0 0.0
    %1244 = vmatprep.subr.mxu0 0.0
    %1245 = vmatpush1.msra.mxu0 0.0
    %1246 = vmatprep.subr.mxu0 0.0
    %1247 = vmatpush1.msra.mxu0 0.0
    %1248 = vmatprep.mubr.f32.mxu0 0.0
    %1249 = vmatmul.mubr.f32.gmra.mrb[0].mxu0 %v1182
    %v1250 = vpop.f32.mrb[0].mxu0
    %v1251 = vadd.f32 0.0, %v1250
    %v1252 = vpop.f32.mrb[0].mxu0
    %1253 = vdwg.mxu0
    %v1254 = vadd.f32 %v1178, %v1251
    %v1255 = vxor.u32 %v1254, 2147483648
    %v1256 = vmul.f32 %v1255, 1.442695
    %v1257 = vpow.pop %v1256
    %v1258 = vadd.f32 %v1257, 1.0
    %v1259 = vrcp.pop %v1258
    %v1260 = vmul.f32 1.0, %v1259
    %v1261 = vtanh.pop %v1254
    %v1262 = vmul.f32 %v1260, %v1171
    %1264 = vrot.lane.b32.xlu0 %v1261, 64
    %v1265 = vpop.permute.xlu0 %1264
    %v1267 = vmul.f32 %v1260, %v1265
    %1269 = vrot.lane.b32.xlu0 %v1267, 32
    %v1270 = vpop.permute.xlu0 %1269
    %v1272 = vadd.f32 %v1262, %v1270
    %v1273 = vtanh.pop %v1272
    %1275 = vrot.lane.b32.xlu0 %v1273, 64
    %v1276 = vpop.permute.xlu0 %1275
    %v1278 = vmul.f32 %v1260, %v1276
    %v1279 = vld [vmem:[#allocation2 + $0x4] sm:$0x3]
    %1281 = vrot.lane.b32.xlu0 %v1278, 32
    %v1282 = vpop.permute.xlu0 %1281
    %v1283 = vsel %vm156, %v1282, 0
    %1285 = vmatprep.subr.mxu0 0.0
    %1286 = vmatpush1.msra.mxu0 %v1078
    %1287 = vmatprep.subr.mxu0 0.0
    %1288 = vmatpush1.msra.mxu0 %v1079
    %1289 = vmatprep.subr.mxu0 0.0
    %1290 = vmatpush1.msra.mxu0 %v1080
    %1291 = vmatprep.subr.mxu0 0.0
    %1292 = vmatpush1.msra.mxu0 %v1081
    %1293 = vmatprep.subr.mxu0 0.0
    %1294 = vmatpush1.msra.mxu0 0.0
    %1295 = vmatprep.subr.mxu0 0.0
    %1296 = vmatpush1.msra.mxu0 0.0
    %1297 = vmatprep.subr.mxu0 0.0
    %1298 = vmatpush1.msra.mxu0 0.0
    %1299 = vmatprep.subr.mxu0 0.0
    %1300 = vmatpush1.msra.mxu0 0.0
    %1301 = vmatprep.subr.mxu0 0.0
    %1302 = vmatpush1.msra.mxu0 0.0
    %1303 = vmatprep.subr.mxu0 0.0
    %1304 = vmatpush1.msra.mxu0 0.0
    %1305 = vmatprep.subr.mxu0 0.0
    %1306 = vmatpush1.msra.mxu0 0.0
    %1307 = vmatprep.subr.mxu0 0.0
    %1308 = vmatpush1.msra.mxu0 0.0
    %1309 = vmatprep.subr.mxu0 0.0
    %1310 = vmatpush1.msra.mxu0 0.0
    %1311 = vmatprep.subr.mxu0 0.0
    %1312 = vmatpush1.msra.mxu0 0.0
    %1313 = vmatprep.subr.mxu0 0.0
    %1314 = vmatpush1.msra.mxu0 0.0
    %1315 = vmatprep.subr.mxu0 0.0
    %1316 = vmatpush1.msra.mxu0 0.0
    %1317 = vmatprep.subr.mxu0 0.0
    %1318 = vmatpush1.msra.mxu0 0.0
    %1319 = vmatprep.subr.mxu0 0.0
    %1320 = vmatpush1.msra.mxu0 0.0
    %1321 = vmatprep.subr.mxu0 0.0
    %1322 = vmatpush1.msra.mxu0 0.0
    %1323 = vmatprep.subr.mxu0 0.0
    %1324 = vmatpush1.msra.mxu0 0.0
    %1325 = vmatprep.subr.mxu0 0.0
    %1326 = vmatpush1.msra.mxu0 0.0
    %1327 = vmatprep.subr.mxu0 0.0
    %1328 = vmatpush1.msra.mxu0 0.0
    %1329 = vmatprep.subr.mxu0 0.0
    %1330 = vmatpush1.msra.mxu0 0.0
    %1331 = vmatprep.subr.mxu0 0.0
    %1332 = vmatpush1.msra.mxu0 0.0
    %1333 = vmatprep.subr.mxu0 0.0
    %1334 = vmatpush1.msra.mxu0 0.0
    %1335 = vmatprep.subr.mxu0 0.0
    %1336 = vmatpush1.msra.mxu0 0.0
    %1337 = vmatprep.subr.mxu0 0.0
    %1338 = vmatpush1.msra.mxu0 0.0
    %1339 = vmatprep.subr.mxu0 0.0
    %1340 = vmatpush1.msra.mxu0 0.0
    %1341 = vmatprep.subr.mxu0 0.0
    %1342 = vmatpush1.msra.mxu0 0.0
    %1343 = vmatprep.subr.mxu0 0.0
    %1344 = vmatpush1.msra.mxu0 0.0
    %1345 = vmatprep.subr.mxu0 0.0
    %1346 = vmatpush1.msra.mxu0 0.0
    %1347 = vmatprep.subr.mxu0 0.0
    %1348 = vmatpush1.msra.mxu0 0.0
    %1349 = vmatprep.mubr.f32.mxu0 0.0
    %1350 = vmatmul.mubr.f32.gmra.mrb[0].mxu0 %v1283
    %v1351 = vpop.f32.mrb[0].mxu0
    %v1352 = vadd.f32 0.0, %v1351
    %v1353 = vpop.f32.mrb[0].mxu0
    %1354 = vdwg.mxu0
    %v1355 = vadd.f32 %v1279, %v1352
    %v1356 = vxor.u32 %v1355, 2147483648
    %v1357 = vmul.f32 %v1356, 1.442695
    %v1358 = vpow.pop %v1357
    %v1359 = vadd.f32 %v1358, 1.0
    %v1360 = vrcp.pop %v1359
    %v1361 = vmul.f32 1.0, %v1360
    %v1362 = vtanh.pop %v1355
    %v1363 = vmul.f32 %v1361, %v1272
    %1365 = vrot.lane.b32.xlu0 %v1362, 64
    %v1366 = vpop.permute.xlu0 %1365
    %v1368 = vmul.f32 %v1361, %v1366
    %1370 = vrot.lane.b32.xlu0 %v1368, 32
    %v1371 = vpop.permute.xlu0 %1370
    %v1373 = vadd.f32 %v1363, %v1371
    %v1374 = vtanh.pop %v1373
    %1376 = vrot.lane.b32.xlu0 %v1374, 64
    %v1377 = vpop.permute.xlu0 %1376
    %v1379 = vmul.f32 %v1361, %v1377
    %v1380 = vld [vmem:[#allocation2 + $0x6] sm:$0x3]
    %1382 = vrot.lane.b32.xlu0 %v1379, 32
    %v1383 = vpop.permute.xlu0 %1382
    %v1384 = vsel %vm156, %v1383, 0
    %1386 = vmatprep.subr.mxu0 0.0
    %1387 = vmatpush1.msra.mxu0 %v1078
    %1388 = vmatprep.subr.mxu0 0.0
    %1389 = vmatpush1.msra.mxu0 %v1079
    %1390 = vmatprep.subr.mxu0 0.0
    %1391 = vmatpush1.msra.mxu0 %v1080
    %1392 = vmatprep.subr.mxu0 0.0
    %1393 = vmatpush1.msra.mxu0 %v1081
    %1394 = vmatprep.subr.mxu0 0.0
    %1395 = vmatpush1.msra.mxu0 0.0
    %1396 = vmatprep.subr.mxu0 0.0
    %1397 = vmatpush1.msra.mxu0 0.0
    %1398 = vmatprep.subr.mxu0 0.0
    %1399 = vmatpush1.msra.mxu0 0.0
    %1400 = vmatprep.subr.mxu0 0.0
    %1401 = vmatpush1.msra.mxu0 0.0
    %1402 = vmatprep.subr.mxu0 0.0
    %1403 = vmatpush1.msra.mxu0 0.0
    %1404 = vmatprep.subr.mxu0 0.0
    %1405 = vmatpush1.msra.mxu0 0.0
    %1406 = vmatprep.subr.mxu0 0.0
    %1407 = vmatpush1.msra.mxu0 0.0
    %1408 = vmatprep.subr.mxu0 0.0
    %1409 = vmatpush1.msra.mxu0 0.0
    %1410 = vmatprep.subr.mxu0 0.0
    %1411 = vmatpush1.msra.mxu0 0.0
    %1412 = vmatprep.subr.mxu0 0.0
    %1413 = vmatpush1.msra.mxu0 0.0
    %1414 = vmatprep.subr.mxu0 0.0
    %1415 = vmatpush1.msra.mxu0 0.0
    %1416 = vmatprep.subr.mxu0 0.0
    %1417 = vmatpush1.msra.mxu0 0.0
    %1418 = vmatprep.subr.mxu0 0.0
    %1419 = vmatpush1.msra.mxu0 0.0
    %1420 = vmatprep.subr.mxu0 0.0
    %1421 = vmatpush1.msra.mxu0 0.0
    %1422 = vmatprep.subr.mxu0 0.0
    %1423 = vmatpush1.msra.mxu0 0.0
    %1424 = vmatprep.subr.mxu0 0.0
    %1425 = vmatpush1.msra.mxu0 0.0
    %1426 = vmatprep.subr.mxu0 0.0
    %1427 = vmatpush1.msra.mxu0 0.0
    %1428 = vmatprep.subr.mxu0 0.0
    %1429 = vmatpush1.msra.mxu0 0.0
    %1430 = vmatprep.subr.mxu0 0.0
    %1431 = vmatpush1.msra.mxu0 0.0
    %1432 = vmatprep.subr.mxu0 0.0
    %1433 = vmatpush1.msra.mxu0 0.0
    %1434 = vmatprep.subr.mxu0 0.0
    %1435 = vmatpush1.msra.mxu0 0.0
    %1436 = vmatprep.subr.mxu0 0.0
    %1437 = vmatpush1.msra.mxu0 0.0
    %1438 = vmatprep.subr.mxu0 0.0
    %1439 = vmatpush1.msra.mxu0 0.0
    %1440 = vmatprep.subr.mxu0 0.0
    %1441 = vmatpush1.msra.mxu0 0.0
    %1442 = vmatprep.subr.mxu0 0.0
    %1443 = vmatpush1.msra.mxu0 0.0
    %1444 = vmatprep.subr.mxu0 0.0
    %1445 = vmatpush1.msra.mxu0 0.0
    %1446 = vmatprep.subr.mxu0 0.0
    %1447 = vmatpush1.msra.mxu0 0.0
    %1448 = vmatprep.subr.mxu0 0.0
    %1449 = vmatpush1.msra.mxu0 0.0
    %1450 = vmatprep.mubr.f32.mxu0 0.0
    %1451 = vmatmul.mubr.f32.gmra.mrb[0].mxu0 %v1384
    %v1452 = vpop.f32.mrb[0].mxu0
    %v1453 = vadd.f32 0.0, %v1452
    %v1454 = vpop.f32.mrb[0].mxu0
    %1455 = vdwg.mxu0
    %v1456 = vadd.f32 %v1380, %v1453
    %v1457 = vxor.u32 %v1456, 2147483648
    %v1458 = vmul.f32 %v1457, 1.442695
    %v1459 = vpow.pop %v1458
    %v1460 = vadd.f32 %v1459, 1.0
    %v1461 = vrcp.pop %v1460
    %v1462 = vmul.f32 1.0, %v1461
    %v1463 = vtanh.pop %v1456
    %v1464 = vmul.f32 %v1462, %v1373
    %1466 = vrot.lane.b32.xlu0 %v1463, 64
    %v1467 = vpop.permute.xlu0 %1466
    %v1469 = vmul.f32 %v1462, %v1467
    %1471 = vrot.lane.b32.xlu0 %v1469, 32
    %v1472 = vpop.permute.xlu0 %1471
    %v1474 = vadd.f32 %v1464, %v1472
    %v1475 = vtanh.pop %v1474
    %1477 = vrot.lane.b32.xlu0 %v1475, 64
    %v1478 = vpop.permute.xlu0 %1477
    %v1480 = vmul.f32 %v1462, %v1478
    %v1481 = vld [vmem:[#allocation2 + $0x8] sm:$0x3]
    %1483 = vrot.lane.b32.xlu0 %v1480, 32
    %v1484 = vpop.permute.xlu0 %1483
    %v1485 = vsel %vm156, %v1484, 0
    %1487 = vmatprep.subr.mxu0 0.0
    %1488 = vmatpush1.msra.mxu0 %v1078
    %1489 = vmatprep.subr.mxu0 0.0
    %1490 = vmatpush1.msra.mxu0 %v1079
    %1491 = vmatprep.subr.mxu0 0.0
    %1492 = vmatpush1.msra.mxu0 %v1080
    %1493 = vmatprep.subr.mxu0 0.0
    %1494 = vmatpush1.msra.mxu0 %v1081
    %1495 = vmatprep.subr.mxu0 0.0
    %1496 = vmatpush1.msra.mxu0 0.0
    %1497 = vmatprep.subr.mxu0 0.0
    %1498 = vmatpush1.msra.mxu0 0.0
    %1499 = vmatprep.subr.mxu0 0.0
    %1500 = vmatpush1.msra.mxu0 0.0
    %1501 = vmatprep.subr.mxu0 0.0
    %1502 = vmatpush1.msra.mxu0 0.0
    %1503 = vmatprep.subr.mxu0 0.0
    %1504 = vmatpush1.msra.mxu0 0.0
    %1505 = vmatprep.subr.mxu0 0.0
    %1506 = vmatpush1.msra.mxu0 0.0
    %1507 = vmatprep.subr.mxu0 0.0
    %1508 = vmatpush1.msra.mxu0 0.0
    %1509 = vmatprep.subr.mxu0 0.0
    %1510 = vmatpush1.msra.mxu0 0.0
    %1511 = vmatprep.subr.mxu0 0.0
    %1512 = vmatpush1.msra.mxu0 0.0
    %1513 = vmatprep.subr.mxu0 0.0
    %1514 = vmatpush1.msra.mxu0 0.0
    %1515 = vmatprep.subr.mxu0 0.0
    %1516 = vmatpush1.msra.mxu0 0.0
    %1517 = vmatprep.subr.mxu0 0.0
    %1518 = vmatpush1.msra.mxu0 0.0
    %1519 = vmatprep.subr.mxu0 0.0
    %1520 = vmatpush1.msra.mxu0 0.0
    %1521 = vmatprep.subr.mxu0 0.0
    %1522 = vmatpush1.msra.mxu0 0.0
    %1523 = vmatprep.subr.mxu0 0.0
    %1524 = vmatpush1.msra.mxu0 0.0
    %1525 = vmatprep.subr.mxu0 0.0
    %1526 = vmatpush1.msra.mxu0 0.0
    %1527 = vmatprep.subr.mxu0 0.0
    %1528 = vmatpush1.msra.mxu0 0.0
    %1529 = vmatprep.subr.mxu0 0.0
    %1530 = vmatpush1.msra.mxu0 0.0
    %1531 = vmatprep.subr.mxu0 0.0
    %1532 = vmatpush1.msra.mxu0 0.0
    %1533 = vmatprep.subr.mxu0 0.0
    %1534 = vmatpush1.msra.mxu0 0.0
    %1535 = vmatprep.subr.mxu0 0.0
    %1536 = vmatpush1.msra.mxu0 0.0
    %1537 = vmatprep.subr.mxu0 0.0
    %1538 = vmatpush1.msra.mxu0 0.0
    %1539 = vmatprep.subr.mxu0 0.0
    %1540 = vmatpush1.msra.mxu0 0.0
    %1541 = vmatprep.subr.mxu0 0.0
    %1542 = vmatpush1.msra.mxu0 0.0
    %1543 = vmatprep.subr.mxu0 0.0
    %1544 = vmatpush1.msra.mxu0 0.0
    %1545 = vmatprep.subr.mxu0 0.0
    %1546 = vmatpush1.msra.mxu0 0.0
    %1547 = vmatprep.subr.mxu0 0.0
    %1548 = vmatpush1.msra.mxu0 0.0
    %1549 = vmatprep.subr.mxu0 0.0
    %1550 = vmatpush1.msra.mxu0 0.0
    %1551 = vmatprep.mubr.f32.mxu0 0.0
    %1552 = vmatmul.mubr.f32.gmra.mrb[0].mxu0 %v1485
    %v1553 = vpop.f32.mrb[0].mxu0
    %v1554 = vadd.f32 0.0, %v1553
    %v1555 = vpop.f32.mrb[0].mxu0
    %1556 = vdwg.mxu0
    %v1557 = vadd.f32 %v1481, %v1554
    %v1558 = vxor.u32 %v1557, 2147483648
    %v1559 = vmul.f32 %v1558, 1.442695
    %v1560 = vpow.pop %v1559
    %v1561 = vadd.f32 %v1560, 1.0
    %v1562 = vrcp.pop %v1561
    %v1563 = vmul.f32 1.0, %v1562
    %v1564 = vtanh.pop %v1557
    %v1565 = vmul.f32 %v1563, %v1474
    %1567 = vrot.lane.b32.xlu0 %v1564, 64
    %v1568 = vpop.permute.xlu0 %1567
    %v1570 = vmul.f32 %v1563, %v1568
    %1572 = vrot.lane.b32.xlu0 %v1570, 32
    %v1573 = vpop.permute.xlu0 %1572
    %v1575 = vadd.f32 %v1565, %v1573
    %v1576 = vtanh.pop %v1575
    %1578 = vrot.lane.b32.xlu0 %v1576, 64
    %v1579 = vpop.permute.xlu0 %1578
    %v1581 = vmul.f32 %v1563, %v1579
    %v1582 = vld [vmem:[#allocation2 + $0xa] sm:$0x3]
    %1584 = vrot.lane.b32.xlu0 %v1581, 32
    %v1585 = vpop.permute.xlu0 %1584
    %v1586 = vsel %vm156, %v1585, 0
    %1588 = vmatprep.subr.mxu0 0.0
    %1589 = vmatpush1.msra.mxu0 %v1078
    %1590 = vmatprep.subr.mxu0 0.0
    %1591 = vmatpush1.msra.mxu0 %v1079
    %1592 = vmatprep.subr.mxu0 0.0
    %1593 = vmatpush1.msra.mxu0 %v1080
    %1594 = vmatprep.subr.mxu0 0.0
    %1595 = vmatpush1.msra.mxu0 %v1081
    %1596 = vmatprep.subr.mxu0 0.0
    %1597 = vmatpush1.msra.mxu0 0.0
    %1598 = vmatprep.subr.mxu0 0.0
    %1599 = vmatpush1.msra.mxu0 0.0
    %1600 = vmatprep.subr.mxu0 0.0
    %1601 = vmatpush1.msra.mxu0 0.0
    %1602 = vmatprep.subr.mxu0 0.0
    %1603 = vmatpush1.msra.mxu0 0.0
    %1604 = vmatprep.subr.mxu0 0.0
    %1605 = vmatpush1.msra.mxu0 0.0
    %1606 = vmatprep.subr.mxu0 0.0
    %1607 = vmatpush1.msra.mxu0 0.0
    %1608 = vmatprep.subr.mxu0 0.0
    %1609 = vmatpush1.msra.mxu0 0.0
    %1610 = vmatprep.subr.mxu0 0.0
    %1611 = vmatpush1.msra.mxu0 0.0
    %1612 = vmatprep.subr.mxu0 0.0
    %1613 = vmatpush1.msra.mxu0 0.0
    %1614 = vmatprep.subr.mxu0 0.0
    %1615 = vmatpush1.msra.mxu0 0.0
    %1616 = vmatprep.subr.mxu0 0.0
    %1617 = vmatpush1.msra.mxu0 0.0
    %1618 = vmatprep.subr.mxu0 0.0
    %1619 = vmatpush1.msra.mxu0 0.0
    %1620 = vmatprep.subr.mxu0 0.0
    %1621 = vmatpush1.msra.mxu0 0.0
    %1622 = vmatprep.subr.mxu0 0.0
    %1623 = vmatpush1.msra.mxu0 0.0
    %1624 = vmatprep.subr.mxu0 0.0
    %1625 = vmatpush1.msra.mxu0 0.0
    %1626 = vmatprep.subr.mxu0 0.0
    %1627 = vmatpush1.msra.mxu0 0.0
    %1628 = vmatprep.subr.mxu0 0.0
    %1629 = vmatpush1.msra.mxu0 0.0
    %1630 = vmatprep.subr.mxu0 0.0
    %1631 = vmatpush1.msra.mxu0 0.0
    %1632 = vmatprep.subr.mxu0 0.0
    %1633 = vmatpush1.msra.mxu0 0.0
    %1634 = vmatprep.subr.mxu0 0.0
    %1635 = vmatpush1.msra.mxu0 0.0
    %1636 = vmatprep.subr.mxu0 0.0
    %1637 = vmatpush1.msra.mxu0 0.0
    %1638 = vmatprep.subr.mxu0 0.0
    %1639 = vmatpush1.msra.mxu0 0.0
    %1640 = vmatprep.subr.mxu0 0.0
    %1641 = vmatpush1.msra.mxu0 0.0
    %1642 = vmatprep.subr.mxu0 0.0
    %1643 = vmatpush1.msra.mxu0 0.0
    %1644 = vmatprep.subr.mxu0 0.0
    %1645 = vmatpush1.msra.mxu0 0.0
    %1646 = vmatprep.subr.mxu0 0.0
    %1647 = vmatpush1.msra.mxu0 0.0
    %1648 = vmatprep.subr.mxu0 0.0
    %1649 = vmatpush1.msra.mxu0 0.0
    %1650 = vmatprep.subr.mxu0 0.0
    %1651 = vmatpush1.msra.mxu0 0.0
    %1652 = vmatprep.mubr.f32.mxu0 0.0
    %1653 = vmatmul.mubr.f32.gmra.mrb[0].mxu0 %v1586
    %v1654 = vpop.f32.mrb[0].mxu0
    %v1655 = vadd.f32 0.0, %v1654
    %v1656 = vpop.f32.mrb[0].mxu0
    %1657 = vdwg.mxu0
    %v1658 = vadd.f32 %v1582, %v1655
    %v1659 = vxor.u32 %v1658, 2147483648
    %v1660 = vmul.f32 %v1659, 1.442695
    %v1661 = vpow.pop %v1660
    %v1662 = vadd.f32 %v1661, 1.0
    %v1663 = vrcp.pop %v1662
    %v1664 = vmul.f32 1.0, %v1663
    %v1665 = vtanh.pop %v1658
    %v1666 = vmul.f32 %v1664, %v1575
    %1668 = vrot.lane.b32.xlu0 %v1665, 64
    %v1669 = vpop.permute.xlu0 %1668
    %v1671 = vmul.f32 %v1664, %v1669
    %1673 = vrot.lane.b32.xlu0 %v1671, 32
    %v1674 = vpop.permute.xlu0 %1673
    %v1676 = vadd.f32 %v1666, %v1674
    %v1677 = vtanh.pop %v1676
    %1679 = vrot.lane.b32.xlu0 %v1677, 64
    %v1680 = vpop.permute.xlu0 %1679
    %v1682 = vmul.f32 %v1664, %v1680
    %v1683 = vld [vmem:[#allocation2 + $0xc] sm:$0x3]
    %1685 = vrot.lane.b32.xlu0 %v1682, 32
    %v1686 = vpop.permute.xlu0 %1685
    %v1687 = vsel %vm156, %v1686, 0
    %1689 = vmatprep.subr.mxu0 0.0
    %1690 = vmatpush1.msra.mxu0 %v1078
    %1691 = vmatprep.subr.mxu0 0.0
    %1692 = vmatpush1.msra.mxu0 %v1079
    %1693 = vmatprep.subr.mxu0 0.0
    %1694 = vmatpush1.msra.mxu0 %v1080
    %1695 = vmatprep.subr.mxu0 0.0
    %1696 = vmatpush1.msra.mxu0 %v1081
    %1697 = vmatprep.subr.mxu0 0.0
    %1698 = vmatpush1.msra.mxu0 0.0
    %1699 = vmatprep.subr.mxu0 0.0
    %1700 = vmatpush1.msra.mxu0 0.0
    %1701 = vmatprep.subr.mxu0 0.0
    %1702 = vmatpush1.msra.mxu0 0.0
    %1703 = vmatprep.subr.mxu0 0.0
    %1704 = vmatpush1.msra.mxu0 0.0
    %1705 = vmatprep.subr.mxu0 0.0
    %1706 = vmatpush1.msra.mxu0 0.0
    %1707 = vmatprep.subr.mxu0 0.0
    %1708 = vmatpush1.msra.mxu0 0.0
    %1709 = vmatprep.subr.mxu0 0.0
    %1710 = vmatpush1.msra.mxu0 0.0
    %1711 = vmatprep.subr.mxu0 0.0
    %1712 = vmatpush1.msra.mxu0 0.0
    %1713 = vmatprep.subr.mxu0 0.0
    %1714 = vmatpush1.msra.mxu0 0.0
    %1715 = vmatprep.subr.mxu0 0.0
    %1716 = vmatpush1.msra.mxu0 0.0
    %1717 = vmatprep.subr.mxu0 0.0
    %1718 = vmatpush1.msra.mxu0 0.0
    %1719 = vmatprep.subr.mxu0 0.0
    %1720 = vmatpush1.msra.mxu0 0.0
    %1721 = vmatprep.subr.mxu0 0.0
    %1722 = vmatpush1.msra.mxu0 0.0
    %1723 = vmatprep.subr.mxu0 0.0
    %1724 = vmatpush1.msra.mxu0 0.0
    %1725 = vmatprep.subr.mxu0 0.0
    %1726 = vmatpush1.msra.mxu0 0.0
    %1727 = vmatprep.subr.mxu0 0.0
    %1728 = vmatpush1.msra.mxu0 0.0
    %1729 = vmatprep.subr.mxu0 0.0
    %1730 = vmatpush1.msra.mxu0 0.0
    %1731 = vmatprep.subr.mxu0 0.0
    %1732 = vmatpush1.msra.mxu0 0.0
    %1733 = vmatprep.subr.mxu0 0.0
    %1734 = vmatpush1.msra.mxu0 0.0
    %1735 = vmatprep.subr.mxu0 0.0
    %1736 = vmatpush1.msra.mxu0 0.0
    %1737 = vmatprep.subr.mxu0 0.0
    %1738 = vmatpush1.msra.mxu0 0.0
    %1739 = vmatprep.subr.mxu0 0.0
    %1740 = vmatpush1.msra.mxu0 0.0
    %1741 = vmatprep.subr.mxu0 0.0
    %1742 = vmatpush1.msra.mxu0 0.0
    %1743 = vmatprep.subr.mxu0 0.0
    %1744 = vmatpush1.msra.mxu0 0.0
    %1745 = vmatprep.subr.mxu0 0.0
    %1746 = vmatpush1.msra.mxu0 0.0
    %1747 = vmatprep.subr.mxu0 0.0
    %1748 = vmatpush1.msra.mxu0 0.0
    %1749 = vmatprep.subr.mxu0 0.0
    %1750 = vmatpush1.msra.mxu0 0.0
    %1751 = vmatprep.subr.mxu0 0.0
    %1752 = vmatpush1.msra.mxu0 0.0
    %1753 = vmatprep.mubr.f32.mxu0 0.0
    %1754 = vmatmul.mubr.f32.gmra.mrb[0].mxu0 %v1687
    %v1755 = vpop.f32.mrb[0].mxu0
    %v1756 = vadd.f32 0.0, %v1755
    %v1757 = vpop.f32.mrb[0].mxu0
    %1758 = vdwg.mxu0
    %v1759 = vadd.f32 %v1683, %v1756
    %v1760 = vxor.u32 %v1759, 2147483648
    %v1761 = vmul.f32 %v1760, 1.442695
    %v1762 = vpow.pop %v1761
    %v1763 = vadd.f32 %v1762, 1.0
    %v1764 = vrcp.pop %v1763
    %v1765 = vmul.f32 1.0, %v1764
    %v1766 = vtanh.pop %v1759
    %v1767 = vmul.f32 %v1765, %v1676
    %1769 = vrot.lane.b32.xlu0 %v1766, 64
    %v1770 = vpop.permute.xlu0 %1769
    %v1772 = vmul.f32 %v1765, %v1770
    %1774 = vrot.lane.b32.xlu0 %v1772, 32
    %v1775 = vpop.permute.xlu0 %1774
    %v1777 = vadd.f32 %v1767, %v1775
    %v1778 = vtanh.pop %v1777
    %1780 = vrot.lane.b32.xlu0 %v1778, 64
    %v1781 = vpop.permute.xlu0 %1780
    %v1783 = vmul.f32 %v1765, %v1781
    %v1784 = vld [vmem:[#allocation2 + $0xe] sm:$0x3]
    %1786 = vrot.lane.b32.xlu0 %v1783, 32
    %v1787 = vpop.permute.xlu0 %1786
    %v1788 = vsel %vm156, %v1787, 0
    %1790 = vmatprep.subr.mxu0 0.0
    %1791 = vmatpush1.msra.mxu0 %v1078
    %1792 = vmatprep.subr.mxu0 0.0
    %1793 = vmatpush1.msra.mxu0 %v1079
    %1794 = vmatprep.subr.mxu0 0.0
    %1795 = vmatpush1.msra.mxu0 %v1080
    %1796 = vmatprep.subr.mxu0 0.0
    %1797 = vmatpush1.msra.mxu0 %v1081
    %1798 = vmatprep.subr.mxu0 0.0
    %1799 = vmatpush1.msra.mxu0 0.0
    %1800 = vmatprep.subr.mxu0 0.0
    %1801 = vmatpush1.msra.mxu0 0.0
    %1802 = vmatprep.subr.mxu0 0.0
    %1803 = vmatpush1.msra.mxu0 0.0
    %1804 = vmatprep.subr.mxu0 0.0
    %1805 = vmatpush1.msra.mxu0 0.0
    %1806 = vmatprep.subr.mxu0 0.0
    %1807 = vmatpush1.msra.mxu0 0.0
    %1808 = vmatprep.subr.mxu0 0.0
    %1809 = vmatpush1.msra.mxu0 0.0
    %1810 = vmatprep.subr.mxu0 0.0
    %1811 = vmatpush1.msra.mxu0 0.0
    %1812 = vmatprep.subr.mxu0 0.0
    %1813 = vmatpush1.msra.mxu0 0.0
    %1814 = vmatprep.subr.mxu0 0.0
    %1815 = vmatpush1.msra.mxu0 0.0
    %1816 = vmatprep.subr.mxu0 0.0
    %1817 = vmatpush1.msra.mxu0 0.0
    %1818 = vmatprep.subr.mxu0 0.0
    %1819 = vmatpush1.msra.mxu0 0.0
    %1820 = vmatprep.subr.mxu0 0.0
    %1821 = vmatpush1.msra.mxu0 0.0
    %1822 = vmatprep.subr.mxu0 0.0
    %1823 = vmatpush1.msra.mxu0 0.0
    %1824 = vmatprep.subr.mxu0 0.0
    %1825 = vmatpush1.msra.mxu0 0.0
    %1826 = vmatprep.subr.mxu0 0.0
    %1827 = vmatpush1.msra.mxu0 0.0
    %1828 = vmatprep.subr.mxu0 0.0
    %1829 = vmatpush1.msra.mxu0 0.0
    %1830 = vmatprep.subr.mxu0 0.0
    %1831 = vmatpush1.msra.mxu0 0.0
    %1832 = vmatprep.subr.mxu0 0.0
    %1833 = vmatpush1.msra.mxu0 0.0
    %1834 = vmatprep.subr.mxu0 0.0
    %1835 = vmatpush1.msra.mxu0 0.0
    %1836 = vmatprep.subr.mxu0 0.0
    %1837 = vmatpush1.msra.mxu0 0.0
    %1838 = vmatprep.subr.mxu0 0.0
    %1839 = vmatpush1.msra.mxu0 0.0
    %1840 = vmatprep.subr.mxu0 0.0
    %1841 = vmatpush1.msra.mxu0 0.0
    %1842 = vmatprep.subr.mxu0 0.0
    %1843 = vmatpush1.msra.mxu0 0.0
    %1844 = vmatprep.subr.mxu0 0.0
    %1845 = vmatpush1.msra.mxu0 0.0
    %1846 = vmatprep.subr.mxu0 0.0
    %1847 = vmatpush1.msra.mxu0 0.0
    %1848 = vmatprep.subr.mxu0 0.0
    %1849 = vmatpush1.msra.mxu0 0.0
    %1850 = vmatprep.subr.mxu0 0.0
    %1851 = vmatpush1.msra.mxu0 0.0
    %1852 = vmatprep.subr.mxu0 0.0
    %1853 = vmatpush1.msra.mxu0 0.0
    %1854 = vmatprep.mubr.f32.mxu0 0.0
    %1855 = vmatmul.mubr.f32.gmra.mrb[0].mxu0 %v1788
    %v1856 = vpop.f32.mrb[0].mxu0
    %v1857 = vadd.f32 0.0, %v1856
    %v1858 = vpop.f32.mrb[0].mxu0
    %1859 = vdwg.mxu0
    %v1860 = vadd.f32 %v1784, %v1857
    %v1861 = vxor.u32 %v1860, 2147483648
    %v1862 = vmul.f32 %v1861, 1.442695
    %v1863 = vpow.pop %v1862
    %v1864 = vadd.f32 %v1863, 1.0
    %v1865 = vrcp.pop %v1864
    %v1866 = vmul.f32 1.0, %v1865
    %v1867 = vtanh.pop %v1860
    %v1868 = vmul.f32 %v1866, %v1777
    %1870 = vrot.lane.b32.xlu0 %v1867, 64
    %v1871 = vpop.permute.xlu0 %1870
    %v1873 = vmul.f32 %v1866, %v1871
    %1875 = vrot.lane.b32.xlu0 %v1873, 32
    %v1876 = vpop.permute.xlu0 %1875
    %v1878 = vadd.f32 %v1868, %v1876
    %v1879 = vtanh.pop %v1878
    %1881 = vrot.lane.b32.xlu0 %v1879, 64
    %v1882 = vpop.permute.xlu0 %1881
    %v1884 = vmul.f32 %v1866, %v1882
    %v1885 = vld [vmem:[%s7] sm:$0xff]
    %v1886 = vld [vmem:[%s7 + $0x8] sm:$0xff]
    %v1887 = vld [vmem:[%s7 + $0x10] sm:$0xff]
    %v1888 = vld [vmem:[%s7 + $0x18] sm:$0xff]
    %v1889 = vld [vmem:[#allocation7] sm:$0x1]
    %v1891 = vlaneseq
    %v1892 = vshrl.u32 %v1891, 7
    %v1893 = vsub.s32 0, %v1892
    %v1894 = vrot.slane %v1889, %v1893
    %1897 = vrot.lane.b32.xlu0 %v1884, 32
    %v1898 = vpop.permute.xlu0 %1897
    %v1899 = vsel %vm156, %v1898, 0
    %1901 = vmatprep.subr.mxu0 0.0
    %1902 = vmatpush1.msra.mxu0 %v1885
    %1903 = vmatprep.subr.mxu0 0.0
    %1904 = vmatpush1.msra.mxu0 %v1886
    %1905 = vmatprep.subr.mxu0 0.0
    %1906 = vmatpush1.msra.mxu0 %v1887
    %1907 = vmatprep.subr.mxu0 0.0
    %1908 = vmatpush1.msra.mxu0 %v1888
    %1909 = vmatprep.subr.mxu0 0.0
    %1910 = vmatpush1.msra.mxu0 0.0
    %1911 = vmatprep.subr.mxu0 0.0
    %1912 = vmatpush1.msra.mxu0 0.0
    %1913 = vmatprep.subr.mxu0 0.0
    %1914 = vmatpush1.msra.mxu0 0.0
    %1915 = vmatprep.subr.mxu0 0.0
    %1916 = vmatpush1.msra.mxu0 0.0
    %1917 = vmatprep.subr.mxu0 0.0
    %1918 = vmatpush1.msra.mxu0 0.0
    %1919 = vmatprep.subr.mxu0 0.0
    %1920 = vmatpush1.msra.mxu0 0.0
    %1921 = vmatprep.subr.mxu0 0.0
    %1922 = vmatpush1.msra.mxu0 0.0
    %1923 = vmatprep.subr.mxu0 0.0
    %1924 = vmatpush1.msra.mxu0 0.0
    %1925 = vmatprep.subr.mxu0 0.0
    %1926 = vmatpush1.msra.mxu0 0.0
    %1927 = vmatprep.subr.mxu0 0.0
    %1928 = vmatpush1.msra.mxu0 0.0
    %1929 = vmatprep.subr.mxu0 0.0
    %1930 = vmatpush1.msra.mxu0 0.0
    %1931 = vmatprep.subr.mxu0 0.0
    %1932 = vmatpush1.msra.mxu0 0.0
    %1933 = vmatprep.subr.mxu0 0.0
    %1934 = vmatpush1.msra.mxu0 0.0
    %1935 = vmatprep.subr.mxu0 0.0
    %1936 = vmatpush1.msra.mxu0 0.0
    %1937 = vmatprep.subr.mxu0 0.0
    %1938 = vmatpush1.msra.mxu0 0.0
    %1939 = vmatprep.subr.mxu0 0.0
    %1940 = vmatpush1.msra.mxu0 0.0
    %1941 = vmatprep.subr.mxu0 0.0
    %1942 = vmatpush1.msra.mxu0 0.0
    %1943 = vmatprep.subr.mxu0 0.0
    %1944 = vmatpush1.msra.mxu0 0.0
    %1945 = vmatprep.subr.mxu0 0.0
    %1946 = vmatpush1.msra.mxu0 0.0
    %1947 = vmatprep.subr.mxu0 0.0
    %1948 = vmatpush1.msra.mxu0 0.0
    %1949 = vmatprep.subr.mxu0 0.0
    %1950 = vmatpush1.msra.mxu0 0.0
    %1951 = vmatprep.subr.mxu0 0.0
    %1952 = vmatpush1.msra.mxu0 0.0
    %1953 = vmatprep.subr.mxu0 0.0
    %1954 = vmatpush1.msra.mxu0 0.0
    %1955 = vmatprep.subr.mxu0 0.0
    %1956 = vmatpush1.msra.mxu0 0.0
    %1957 = vmatprep.subr.mxu0 0.0
    %1958 = vmatpush1.msra.mxu0 0.0
    %1959 = vmatprep.subr.mxu0 0.0
    %1960 = vmatpush1.msra.mxu0 0.0
    %1961 = vmatprep.subr.mxu0 0.0
    %1962 = vmatpush1.msra.mxu0 0.0
    %1963 = vmatprep.subr.mxu0 0.0
    %1964 = vmatpush1.msra.mxu0 0.0
    %1965 = vmatprep.mubr.f32.mxu0 0.0
    %1966 = vmatmul.mubr.f32.gmra.mrb[0].mxu0 %v1899
    %v1967 = vpop.f32.mrb[0].mxu0
    %v1968 = vadd.f32 %v1894, %v1967
    %v1969 = vpop.f32.mrb[0].mxu0
    %1970 = vdwg.mxu0
    %vm1971 = vcmask 25600
    %1972 = vst.msk [vmem:[#allocation9] sm:$0x3] %vm1971, %v1968
    // Predicated region
    $region46: #{lstm_model_forward.1} parent=1 // pred_check
      _
    $region47: #{lstm_model_forward.1} parent=1 // pred_check_branch
      %1974 = sbr.rel (0) target = $region49
    $region48: #{lstm_model_forward.1} parent=1 // pred_region
      %s1976 = ssub.s32 32, 32
      %1977 = vsyncadd [#allocation6], %s1976
      %s1979 = sshll.u32 [#allocation9], 4
      %s1980 = int_to_ptr.vmem [resolvable:$true] %s1979
      %1982 = dma.vmem_to_hbm [thread:$0]  %s1980, 32, %s9, [#allocation6]
    $region49: #{lstm_model_forward.1} parent=1 // pred_fallthru
      _
    // Predicated region
    $region50: #{lstm_model_forward.1} parent=1 // pred_check
      _
    $region51: #{lstm_model_forward.1} parent=1 // pred_check_branch
      %1984 = sbr.rel (0) target = $region53
    $region52: #{lstm_model_forward.1} parent=1 // pred_region
      %1985 = dma.done [#allocation6], 32
    $region53: #{lstm_model_forward.1} parent=1 // pred_fallthru
      _
    %1986 = vsyncpa [#allocation5], 1
    %1987 = vsyncpa [#allocation8], 1
    %1988 = vsyncpa [#allocation6], 1

</llo_original>
